<compile_context>
chip_gen: v7x
topology: tpu7x:2x2x1
jax: 0.10.0
libtpu: 0.0.40
codegen_flags: <defaults>
</compile_context>

<pallas_src>
import math
import functools

import jax
import jax.numpy as jnp
from jax import lax
from jax.experimental import pallas as pl
from jax.experimental.pallas import tpu as pltpu


def _bdot(a, b, ca, cb):
    """Batched matmul: batch dim 0 on both operands, contract a-dim ca with b-dim cb."""
    return lax.dot_general(a, b, (((ca,), (cb,)), ((0,), (0,))),
                           preferred_element_type=jnp.float32)


def cross_attn_kernel(xq_ref, ctxT_ref, wqT_ref, qbT_ref, w_kvT_ref, kvbT_ref,
                      woT_ref, boT_ref, out_ref, *, num_heads):
    bb, C, Lq = xq_ref.shape              # (batch_block, channels, H*W)
    _, M, T = ctxT_ref.shape              # context pre-transposed: (bb, M, T)
    dh = C // num_heads
    g = bb * num_heads                    # fused (batch, head) leading dim

    xq_cl = xq_ref[...]                   # (bb, C, Lq) channel-major query map

    # --- Q projection directly in channel-major (transposed) space:
    #     QT[b] = (scale*wq)^T @ xq_cl[b] + scale*(pos_q @ wq + bq)^T
    wqT_b = jnp.broadcast_to(wqT_ref[...], (bb, C, C))
    QT = _bdot(wqT_b, xq_cl, 2, 1) + qbT_ref[...]               # (bb, C, Lq)

    # --- fused K|V projection, computed channel-major (no swapaxes):
    #     KVT[b] = w_kvT @ ctxT[b] + kvbT   (mel_proj, pos_ctx, biases folded)
    w_kvT_b = jnp.broadcast_to(w_kvT_ref[...], (bb, 2 * C, M))
    KVT = _bdot(w_kvT_b, ctxT_ref[...], 2, 1) + kvbT_ref[...]   # (bb, 2C, T)
    KT = KVT[:, :C, :].reshape(g, dh, T)                        # (bb*H, dh, T)
    VT = KVT[:, C:, :].reshape(g, dh, T)                        # (bb*H, dh, T)

    # --- attention with TRANSPOSED scores: sT[g, t, q] = K_t . Q_q
    #     (Lq is the lane dim -> lane-dense softmax, no per-head transposes)
    QT_g = QT.reshape(g, dh, Lq)                                # (bb*H, dh, Lq)
    sT = lax.dot_general(KT, QT_g, (((1,), (1,)), ((0,), (0,))),
                         preferred_element_type=jnp.float32)    # (bb*H, T, Lq)
    sT = sT - jnp.max(sT, axis=1, keepdims=True)                # softmax over T (sublanes)
    p = jnp.exp(sT)
    p = p * pl.reciprocal(jnp.sum(p, axis=1, keepdims=True), approx=True)
    oT = _bdot(VT, p, 2, 1)                                     # (bb*H, dh, Lq)

    # --- head merge = layout-trivial reshape in channel-major space;
    #     output projection + residual scale folded into woT/boT.
    attnT = oT.reshape(bb, C, Lq)
    woT_b = jnp.broadcast_to(woT_ref[...], (bb, C, C))
    outT = _bdot(woT_b, attnT, 2, 1) + boT_ref[...]             # (bb, C, Lq)

    out_ref[...] = xq_cl + outT                                 # residual vs raw query map


def _num_tensorcores():
    """Best-effort TensorCore-per-chip count (1 on v5e/v6e, 2 on v7x)."""
    try:
        info = pltpu.get_tpu_info()
    except Exception:
        return 1
    for attr in ("num_cores", "core_count", "cores_per_chip",
                 "num_tensorcores", "tensorcores_per_chip"):
        n = getattr(info, attr, None)
        if isinstance(n, int) and n >= 1:
            return n
    return 1


def cross_attn_2d(query_map, context_seq, params, *, num_heads,
                  resid_scale=0.5, batch_block=None):
    B, C, H, W = query_map.shape
    Lq = H * W
    _, T, M = context_seq.shape
    assert C % num_heads == 0
    dh = C // num_heads
    # Layout guards: dh = one (or more) f32 sublane tiles keeps the head
    # split/merge reshapes free of VMEM relayouts; T must tile sublanes too.
    assert dh % 8 == 0, "head_dim must be a multiple of 8 (f32 sublane tile)"
    assert T % 8 == 0, "context length must be a multiple of 8"
    assert Lq <= params["pos_q"].shape[1], "H*W exceeds pos_q length"
    assert T <= params["pos_ctx"].shape[1], "T exceeds max_context_len"
    scale = 1.0 / math.sqrt(dh)

    # Default tiling: whole batch in one grid step on single-TC chips
    # (v5e/v6e); split across the 2 TensorCores on v7x when divisible.
    if batch_block is None:
        n_tc = _num_tensorcores()
        batch_block = B // n_tc if (n_tc > 1 and B % n_tc == 0) else B
    assert B % batch_block == 0
    nblk = B // batch_block

    xq = query_map.reshape(B, C, Lq)          # NCHW view, channel-major, no transpose
    ctxT = jnp.swapaxes(context_seq, 1, 2)    # (B, M, T) — tiny XLA transpose, done once

    pos_q = params["pos_q"][0, :Lq]           # (Lq, C)
    pos_ctx = params["pos_ctx"][0, :T]        # (T, C)
    wq, wk, wv, wo = params["wq"], params["wk"], params["wv"], params["wo"]
    bq, bk, bv, bo = params["bq"], params["bk"], params["bv"], params["bo"]
    mel_w, mel_b = params["mel_w"], params["mel_b"]

    # ---- constant folding (tiny one-time XLA ops; constant under jit) ----
    w_kv_full = jnp.concatenate([wk, wv], axis=1)                       # (C, 2C)
    wqT = (wq * scale).T                                                # (C, C)
    qbT = ((pos_q @ wq + bq) * scale).T                                 # (C, Lq)
    w_kvT = (mel_w @ w_kv_full).T                                       # (2C, M)  mel_proj folded, K|V fused
    kvbT = ((mel_b + pos_ctx) @ w_kv_full
            + jnp.concatenate([bk, bv])).T                              # (2C, T)
    woT = (wo * resid_scale).T                                          # (C, C)
    boT = (bo * resid_scale).reshape(C, 1)                              # (C, 1)

    kernel = functools.partial(cross_attn_kernel, num_heads=num_heads)

    def const(shape):
        return pl.BlockSpec(shape, lambda i: (0,) * len(shape))

    out = pl.pallas_call(
        kernel,
        out_shape=jax.ShapeDtypeStruct((B, C, Lq), jnp.float32),
        grid=(nblk,),
        in_specs=[
            pl.BlockSpec((batch_block, C, Lq), lambda i: (i, 0, 0)),    # query map (channel-major)
            pl.BlockSpec((batch_block, M, T), lambda i: (i, 0, 0)),     # mel context, pre-transposed
            const((C, C)),        # wqT   (scale folded)
            const((C, Lq)),       # qbT   (pos_q, bq, scale folded)
            const((2 * C, M)),    # w_kvT (mel_proj folded, K|V fused, pre-transposed)
            const((2 * C, T)),    # kvbT  (mel_b, pos_ctx, bk|bv folded, pre-transposed)
            const((C, C)),        # woT   (resid_scale folded)
            const((C, 1)),        # boT
        ],
        out_specs=pl.BlockSpec((batch_block, C, Lq), lambda i: (i, 0, 0)),
        compiler_params=pltpu.CompilerParams(dimension_semantics=("parallel",)),
    )(xq, ctxT, wqT, qbT, w_kvT, kvbT, woT, boT)

    return out.reshape(B, C, H, W)


def reference(query_map, context_seq, params, *, num_heads, resid_scale=0.5):
    """Pure-JAX reference matching the PyTorch forward (eval mode)."""
    B, C, H, W = query_map.shape
    Lq = H * W
    _, T, M = context_seq.shape
    dh = C // num_heads

    q = query_map.reshape(B, C, Lq).transpose(0, 2, 1) + params["pos_q"][:, :Lq]
    ctx = context_seq @ params["mel_w"] + params["mel_b"]
    ctx = ctx + params["pos_ctx"][:, :T]

    Q = q @ params["wq"] + params["bq"]
    K = ctx @ params["wk"] + params["bk"]
    V = ctx @ params["wv"] + params["bv"]
    Qh = Q.reshape(B, Lq, num_heads, dh).transpose(0, 2, 1, 3)
    Kh = K.reshape(B, T, num_heads, dh).transpose(0, 2, 1, 3)
    Vh = V.reshape(B, T, num_heads, dh).transpose(0, 2, 1, 3)
    s = jnp.einsum('bhqd,bhkd->bhqk', Qh, Kh) / math.sqrt(dh)
    p = jax.nn.softmax(s, axis=-1)
    o = jnp.einsum('bhqk,bhkd->bhqd', p, Vh).transpose(0, 2, 1, 3).reshape(B, Lq, C)
    o = o @ params["wo"] + params["bo"]
    out_map = o.transpose(0, 2, 1).reshape(B, C, H, W)
    return query_map + resid_scale * out_map


def init_params(key, d_model, mel_dim, max_context_len, Lq):
    ks = jax.random.split(key, 12)
    sc_in = 1.0 / math.sqrt(d_model)
    sc_mel = 1.0 / math.sqrt(mel_dim)
    return {
        # nn.Parameter randn
        "pos_q":   jax.random.normal(ks[0], (1, Lq, d_model), jnp.float32),
        "pos_ctx": jax.random.normal(ks[1], (1, max_context_len, d_model), jnp.float32),
        # mel_proj (Linear mel_dim -> d_model), stored as (M, C) = torch weight.T
        "mel_w": jax.random.uniform(ks[2], (mel_dim, d_model), jnp.float32, -sc_mel, sc_mel),
        "mel_b": jax.random.uniform(ks[3], (d_model,), jnp.float32, -sc_mel, sc_mel),
        # MultiheadAttention in_proj split into q/k/v, stored as (C, C) = chunk.T
        "wq": jax.random.uniform(ks[4], (d_model, d_model), jnp.float32, -sc_in, sc_in),
        "wk": jax.random.uniform(ks[5], (d_model, d_model), jnp.float32, -sc_in, sc_in),
        "wv": jax.random.uniform(ks[6], (d_model, d_model), jnp.float32, -sc_in, sc_in),
        "bq": jax.random.uniform(ks[7], (d_model,), jnp.float32, -sc_in, sc_in),
        "bk": jax.random.uniform(ks[8], (d_model,), jnp.float32, -sc_in, sc_in),
        "bv": jax.random.uniform(ks[9], (d_model,), jnp.float32, -sc_in, sc_in),
        # out_proj
        "wo": jax.random.uniform(ks[10], (d_model, d_model), jnp.float32, -sc_in, sc_in),
        "bo": jax.random.uniform(ks[11], (d_model,), jnp.float32, -sc_in, sc_in),
    }


if __name__ == "__main__":
    # Small shapes consistent with the module's forward
    B, d_model, H, W = 2, 32, 8, 8            # query_map: (B, C, H, W)
    num_heads = 4
    mel_dim, max_context_len, T = 16, 32, 16  # context_seq: (B, T, M)
    Lq = H * W

    key = jax.random.PRNGKey(0)
    k_x, k_ctx, k_p = jax.random.split(key, 3)
    query_map = jax.random.normal(k_x, (B, d_model, H, W), jnp.float32)
    context_seq = jax.random.normal(k_ctx, (B, T, mel_dim), jnp.float32)
    params = init_params(k_p, d_model, mel_dim, max_context_len, Lq)

    out = cross_attn_2d(query_map, context_seq, params,
                        num_heads=num_heads, resid_scale=0.5)
    out = jax.block_until_ready(out)

    ref = reference(query_map, context_seq, params,
                    num_heads=num_heads, resid_scale=0.5)
    assert out.shape == (B, d_model, H, W)
    # approx reciprocal in the softmax plus the algebraic weight folding
    # reassociates a few f32 reductions -> slightly relaxed tolerance.
    assert jnp.allclose(out, ref, rtol=5e-3, atol=5e-3), "mismatch vs reference"

    print("KERNEL_OK")
</pallas_src>

<mosaic_0001>
module attributes {stable_mosaic.version = 11 : i64} {
  func.func @cross_attn_kernel(%arg0: i32, %arg1: memref<2x32x64xf32, #tpu.memory_space<vmem>>, %arg2: memref<2x16x16xf32, #tpu.memory_space<vmem>>, %arg3: memref<32x32xf32, #tpu.memory_space<vmem>>, %arg4: memref<32x64xf32, #tpu.memory_space<vmem>>, %arg5: memref<64x16xf32, #tpu.memory_space<vmem>>, %arg6: memref<64x16xf32, #tpu.memory_space<vmem>>, %arg7: memref<32x32xf32, #tpu.memory_space<vmem>>, %arg8: memref<32x1xf32, #tpu.memory_space<vmem>>, %arg9: memref<2x32x64xf32, #tpu.memory_space<vmem>>) attributes {dimension_semantics = [#tpu.dimension_semantics<parallel>], iteration_bounds = array<i64: 1>, scalar_prefetch = 0 : i64, scratch_operands = 0 : i64, tpu.core_type = #tpu.core_type<tc>, window_params = [{transform_indices = @transform_0, window_bounds = array<i64: 2, 32, 64>}, {transform_indices = @transform_1, window_bounds = array<i64: 2, 16, 16>}, {pipeline_mode = #tpu.pipeline_mode<synchronous>, transform_indices = @transform_2, window_bounds = array<i64: 32, 32>}, {pipeline_mode = #tpu.pipeline_mode<synchronous>, transform_indices = @transform_3, window_bounds = array<i64: 32, 64>}, {pipeline_mode = #tpu.pipeline_mode<synchronous>, transform_indices = @transform_4, window_bounds = array<i64: 64, 16>}, {pipeline_mode = #tpu.pipeline_mode<synchronous>, transform_indices = @transform_5, window_bounds = array<i64: 64, 16>}, {pipeline_mode = #tpu.pipeline_mode<synchronous>, transform_indices = @transform_6, window_bounds = array<i64: 32, 32>}, {pipeline_mode = #tpu.pipeline_mode<synchronous>, transform_indices = @transform_7, window_bounds = array<i64: 32, 1>}, {transform_indices = @transform_8, window_bounds = array<i64: 2, 32, 64>}]} {
    %c0 = arith.constant 0 : index
    %c0_0 = arith.constant 0 : index
    %c0_1 = arith.constant 0 : index
    %0 = vector.load %arg1[%c0, %c0_0, %c0_1] : memref<2x32x64xf32, #tpu.memory_space<vmem>>, vector<2x32x64xf32>
    %c0_2 = arith.constant 0 : index
    %c0_3 = arith.constant 0 : index
    %1 = vector.load %arg3[%c0_2, %c0_3] : memref<32x32xf32, #tpu.memory_space<vmem>>, vector<32x32xf32>
    %2 = vector.shape_cast %1 : vector<32x32xf32> to vector<1x32x32xf32>
    %3 = vector.broadcast %2 : vector<1x32x32xf32> to vector<2x32x32xf32>
    %cst = arith.constant dense<0.000000e+00> : vector<2x32x64xf32>
    %4 = tpu.matmul %3, %0, %cst {dimension_numbers = #tpu.dot_dimension_numbers<[2], [1], [1], [2], [0, 0, 0, 1, 1, 2], [0], [0]>} : vector<2x32x32xf32>, vector<2x32x64xf32>, vector<2x32x64xf32> -> vector<2x32x64xf32>
    %c0_4 = arith.constant 0 : index
    %c0_5 = arith.constant 0 : index
    %5 = vector.load %arg4[%c0_4, %c0_5] : memref<32x64xf32, #tpu.memory_space<vmem>>, vector<32x64xf32>
    %6 = vector.shape_cast %5 : vector<32x64xf32> to vector<1x32x64xf32>
    %7 = vector.broadcast %6 : vector<1x32x64xf32> to vector<2x32x64xf32>
    %8 = arith.addf %4, %7 : vector<2x32x64xf32>
    %c0_6 = arith.constant 0 : index
    %c0_7 = arith.constant 0 : index
    %9 = vector.load %arg5[%c0_6, %c0_7] : memref<64x16xf32, #tpu.memory_space<vmem>>, vector<64x16xf32>
    %10 = vector.shape_cast %9 : vector<64x16xf32> to vector<1x64x16xf32>
    %11 = vector.broadcast %10 : vector<1x64x16xf32> to vector<2x64x16xf32>
    %c0_8 = arith.constant 0 : index
    %c0_9 = arith.constant 0 : index
    %c0_10 = arith.constant 0 : index
    %12 = vector.load %arg2[%c0_8, %c0_9, %c0_10] : memref<2x16x16xf32, #tpu.memory_space<vmem>>, vector<2x16x16xf32>
    %cst_11 = arith.constant dense<0.000000e+00> : vector<2x64x16xf32>
    %13 = tpu.matmul %11, %12, %cst_11 {dimension_numbers = #tpu.dot_dimension_numbers<[2], [1], [1], [2], [0, 0, 0, 1, 1, 2], [0], [0]>} : vector<2x64x16xf32>, vector<2x16x16xf32>, vector<2x64x16xf32> -> vector<2x64x16xf32>
    %c0_12 = arith.constant 0 : index
    %c0_13 = arith.constant 0 : index
    %14 = vector.load %arg6[%c0_12, %c0_13] : memref<64x16xf32, #tpu.memory_space<vmem>>, vector<64x16xf32>
    %15 = vector.shape_cast %14 : vector<64x16xf32> to vector<1x64x16xf32>
    %16 = vector.broadcast %15 : vector<1x64x16xf32> to vector<2x64x16xf32>
    %17 = arith.addf %13, %16 : vector<2x64x16xf32>
    %18 = vector.extract_strided_slice %17 {offsets = [0, 0, 0], sizes = [2, 32, 16], strides = [1, 1, 1]} : vector<2x64x16xf32> to vector<2x32x16xf32>
    %19 = vector.shape_cast %18 : vector<2x32x16xf32> to vector<8x8x16xf32>
    %20 = vector.extract_strided_slice %17 {offsets = [0, 32, 0], sizes = [2, 32, 16], strides = [1, 1, 1]} : vector<2x64x16xf32> to vector<2x32x16xf32>
    %21 = vector.shape_cast %20 : vector<2x32x16xf32> to vector<8x8x16xf32>
    %22 = vector.shape_cast %8 : vector<2x32x64xf32> to vector<8x8x64xf32>
    %cst_14 = arith.constant dense<0.000000e+00> : vector<8x16x64xf32>
    %23 = tpu.matmul %19, %22, %cst_14 {dimension_numbers = #tpu.dot_dimension_numbers<[1], [1], [2], [2], [0, 0, 0, 2, 1, 2], [0], [0]>} : vector<8x8x16xf32>, vector<8x8x64xf32>, vector<8x16x64xf32> -> vector<8x16x64xf32>
    %cst_15 = arith.constant dense<0xFF800000> : vector<8x64xf32>
    %24 = vector.multi_reduction <maximumf>, %23, %cst_15 [1] : vector<8x16x64xf32> to vector<8x64xf32>
    %25 = vector.shape_cast %24 : vector<8x64xf32> to vector<8x1x64xf32>
    %26 = vector.broadcast %25 : vector<8x1x64xf32> to vector<8x16x64xf32>
    %27 = arith.subf %23, %26 : vector<8x16x64xf32>
    %28 = math.exp %27 : vector<8x16x64xf32>
    %cst_16 = arith.constant dense<0.000000e+00> : vector<8x64xf32>
    %29 = vector.multi_reduction <add>, %28, %cst_16 [1] : vector<8x16x64xf32> to vector<8x64xf32>
    %30 = vector.shape_cast %29 : vector<8x64xf32> to vector<8x1x64xf32>
    %31 = tpu.reciprocal %30 {approx = true} : vector<8x1x64xf32> -> vector<8x1x64xf32>
    %32 = vector.broadcast %31 : vector<8x1x64xf32> to vector<8x16x64xf32>
    %33 = arith.mulf %28, %32 : vector<8x16x64xf32>
    %cst_17 = arith.constant dense<0.000000e+00> : vector<8x8x64xf32>
    %34 = tpu.matmul %21, %33, %cst_17 {dimension_numbers = #tpu.dot_dimension_numbers<[2], [1], [1], [2], [0, 0, 0, 1, 1, 2], [0], [0]>} : vector<8x8x16xf32>, vector<8x16x64xf32>, vector<8x8x64xf32> -> vector<8x8x64xf32>
    %35 = vector.shape_cast %34 : vector<8x8x64xf32> to vector<2x32x64xf32>
    %c0_18 = arith.constant 0 : index
    %c0_19 = arith.constant 0 : index
    %36 = vector.load %arg7[%c0_18, %c0_19] : memref<32x32xf32, #tpu.memory_space<vmem>>, vector<32x32xf32>
    %37 = vector.shape_cast %36 : vector<32x32xf32> to vector<1x32x32xf32>
    %38 = vector.broadcast %37 : vector<1x32x32xf32> to vector<2x32x32xf32>
    %cst_20 = arith.constant dense<0.000000e+00> : vector<2x32x64xf32>
    %39 = tpu.matmul %38, %35, %cst_20 {dimension_numbers = #tpu.dot_dimension_numbers<[2], [1], [1], [2], [0, 0, 0, 1, 1, 2], [0], [0]>} : vector<2x32x32xf32>, vector<2x32x64xf32>, vector<2x32x64xf32> -> vector<2x32x64xf32>
    %c0_21 = arith.constant 0 : index
    %c0_22 = arith.constant 0 : index
    %40 = vector.load %arg8[%c0_21, %c0_22] : memref<32x1xf32, #tpu.memory_space<vmem>>, vector<32x1xf32>
    %41 = vector.shape_cast %40 : vector<32x1xf32> to vector<1x32x1xf32>
    %42 = vector.broadcast %41 : vector<1x32x1xf32> to vector<2x32x64xf32>
    %43 = arith.addf %39, %42 : vector<2x32x64xf32>
    %44 = arith.addf %0, %43 : vector<2x32x64xf32>
    %c0_23 = arith.constant 0 : index
    %c0_24 = arith.constant 0 : index
    %c0_25 = arith.constant 0 : index
    %45 = vector.load %arg9[%c0_23, %c0_24, %c0_25] : memref<2x32x64xf32, #tpu.memory_space<vmem>>, vector<2x32x64xf32>
    tpu.vector_store %arg9[%c0_23, %c0_24, %c0_25], %44 {strides = array<i32>} : memref<2x32x64xf32, #tpu.memory_space<vmem>>, vector<2x32x64xf32>,
    return
  }
  func.func @transform_0(%arg0: i32) -> (i32, i32, i32) {
    %c0_i32 = arith.constant 0 : i32
    %c0_i32_0 = arith.constant 0 : i32
    %c0_i32_1 = arith.constant 0 : i32
    return %arg0, %c0_i32, %c0_i32_0 : i32, i32, i32
  }
  func.func @transform_1(%arg0: i32) -> (i32, i32, i32) {
    %c0_i32 = arith.constant 0 : i32
    %c0_i32_0 = arith.constant 0 : i32
    %c0_i32_1 = arith.constant 0 : i32
    return %arg0, %c0_i32, %c0_i32_0 : i32, i32, i32
  }
  func.func @transform_2(%arg0: i32) -> (i32, i32) {
    %c0_i32 = arith.constant 0 : i32
    %c0_i32_0 = arith.constant 0 : i32
    %c0_i32_1 = arith.constant 0 : i32
    return %c0_i32, %c0_i32_0 : i32, i32
  }
  func.func @transform_3(%arg0: i32) -> (i32, i32) {
    %c0_i32 = arith.constant 0 : i32
    %c0_i32_0 = arith.constant 0 : i32
    %c0_i32_1 = arith.constant 0 : i32
    return %c0_i32, %c0_i32_0 : i32, i32
  }
  func.func @transform_4(%arg0: i32) -> (i32, i32) {
    %c0_i32 = arith.constant 0 : i32
    %c0_i32_0 = arith.constant 0 : i32
    %c0_i32_1 = arith.constant 0 : i32
    return %c0_i32, %c0_i32_0 : i32, i32
  }
  func.func @transform_5(%arg0: i32) -> (i32, i32) {
    %c0_i32 = arith.constant 0 : i32
    %c0_i32_0 = arith.constant 0 : i32
    %c0_i32_1 = arith.constant 0 : i32
    return %c0_i32, %c0_i32_0 : i32, i32
  }
  func.func @transform_6(%arg0: i32) -> (i32, i32) {
    %c0_i32 = arith.constant 0 : i32
    %c0_i32_0 = arith.constant 0 : i32
    %c0_i32_1 = arith.constant 0 : i32
    return %c0_i32, %c0_i32_0 : i32, i32
  }
  func.func @transform_7(%arg0: i32) -> (i32, i32) {
    %c0_i32 = arith.constant 0 : i32
    %c0_i32_0 = arith.constant 0 : i32
    %c0_i32_1 = arith.constant 0 : i32
    return %c0_i32, %c0_i32_0 : i32, i32
  }
  func.func @transform_8(%arg0: i32) -> (i32, i32, i32) {
    %c0_i32 = arith.constant 0 : i32
    %c0_i32_0 = arith.constant 0 : i32
    %c0_i32_1 = arith.constant 0 : i32
    return %arg0, %c0_i32, %c0_i32_0 : i32, i32, i32
  }
}

</mosaic_0001>

<llo_original>
// kernel: tpu_custom_call.1
$region0: #{tpu_custom_call.1}
  #allocation0 [shape = 'u32[]', space=smem, size = 0x4, offset = 0x4, fixed_abs, tag = 'smem constant byte address 0x4 - core index']
  #allocation1 [shape = 'u32[144,128]{1,0:T(1,128)}', space=vmem, size = 0x12000, scoped, tag = 'internal scratch']
  %s0 = inlined_call_operand.vmem [shape: f32[2,32,64], index: 0, kind: input, shape index: {}]
  %s1 = inlined_call_operand.vmem [shape: f32[2,16,16], index: 1, kind: input, shape index: {}]
  %s2 = inlined_call_operand.vmem [shape: f32[32,32], index: 2, kind: input, shape index: {}]
  %s3 = inlined_call_operand.vmem [shape: f32[32,64], index: 3, kind: input, shape index: {}]
  %s4 = inlined_call_operand.vmem [shape: f32[64,16], index: 4, kind: input, shape index: {}]
  %s5 = inlined_call_operand.vmem [shape: f32[64,16], index: 5, kind: input, shape index: {}]
  %s6 = inlined_call_operand.vmem [shape: f32[32,32], index: 6, kind: input, shape index: {}]
  %s7 = inlined_call_operand.vmem [shape: f32[32,1], index: 7, kind: input, shape index: {}]
  %s8 = inlined_call_operand.hbm [shape: f32[2,32,64], index: 8, kind: output, shape index: {}]
  %s9 = sld [smem:[#allocation0]]
  $region42: #{tpu_custom_call.1} parent=0
    _
  %s11 = ssub.s32 1, %s9
  %s12 = scalar_select 0, %s11, %s9
  $region1: #{tpu_custom_call.1} parent=0
    #allocation2 [shape = 'u8[32768]{0}', space=vmem, size = 0x8000, scoped, tag = 'output window, operand 0, single buffered']
    #allocation3 [shape = 's32[1]{0}', space=sflag, size = 0x4, scoped, tag = 'scoped memory for tpu_custom_call.1']
    %13 = vsyncpa [#allocation3], 0
    // Predicated region
    $region2: #{tpu_custom_call.1} parent=1 // pred_check
      _
    $region3: #{tpu_custom_call.1} parent=1 // pred_check_branch
      %15 = sbr.rel (0) target = $region5
    $region4: #{tpu_custom_call.1} parent=1 // pred_region
      _
    $region5: #{tpu_custom_call.1} parent=1 // pred_fallthru
      _
    // Predicated region
    $region6: #{tpu_custom_call.1} parent=1 // pred_check
      _
    $region7: #{tpu_custom_call.1} parent=1 // pred_check_branch
      %17 = sbr.rel (0) target = $region9
    $region8: #{tpu_custom_call.1} parent=1 // pred_region
      _
    $region9: #{tpu_custom_call.1} parent=1 // pred_fallthru
      _
    // Predicated region
    $region10: #{tpu_custom_call.1} parent=1 // pred_check
      _
    $region11: #{tpu_custom_call.1} parent=1 // pred_check_branch
      %19 = sbr.rel (0) target = $region13
    $region12: #{tpu_custom_call.1} parent=1 // pred_region
      _
    $region13: #{tpu_custom_call.1} parent=1 // pred_fallthru
      _
    // Predicated region
    $region14: #{tpu_custom_call.1} parent=1 // pred_check
      _
    $region15: #{tpu_custom_call.1} parent=1 // pred_check_branch
      %21 = sbr.rel (0) target = $region17
    $region16: #{tpu_custom_call.1} parent=1 // pred_region
      _
    $region17: #{tpu_custom_call.1} parent=1 // pred_fallthru
      _
    // Predicated region
    $region18: #{tpu_custom_call.1} parent=1 // pred_check
      _
    $region19: #{tpu_custom_call.1} parent=1 // pred_check_branch
      %23 = sbr.rel (0) target = $region21
    $region20: #{tpu_custom_call.1} parent=1 // pred_region
      _
    $region21: #{tpu_custom_call.1} parent=1 // pred_fallthru
      _
    // Predicated region
    $region22: #{tpu_custom_call.1} parent=1 // pred_check
      _
    $region23: #{tpu_custom_call.1} parent=1 // pred_check_branch
      %25 = sbr.rel (0) target = $region25
    $region24: #{tpu_custom_call.1} parent=1 // pred_region
      _
    $region25: #{tpu_custom_call.1} parent=1 // pred_fallthru
      _
    // Predicated region
    $region26: #{tpu_custom_call.1} parent=1 // pred_check
      _
    $region27: #{tpu_custom_call.1} parent=1 // pred_check_branch
      %27 = sbr.rel (0) target = $region29
    $region28: #{tpu_custom_call.1} parent=1 // pred_region
      _
    $region29: #{tpu_custom_call.1} parent=1 // pred_fallthru
      _
    // Predicated region
    $region30: #{tpu_custom_call.1} parent=1 // pred_check
      _
    $region31: #{tpu_custom_call.1} parent=1 // pred_check_branch
      %29 = sbr.rel (0) target = $region33
    $region32: #{tpu_custom_call.1} parent=1 // pred_region
      _
    $region33: #{tpu_custom_call.1} parent=1 // pred_fallthru
      _
    %v30 = vld [vmem:[%s0] sm:$0xff]
    %v31 = vld [vmem:[%s0 + $0x8] sm:$0xff]
    %v32 = vld [vmem:[%s0 + $0x10] sm:$0xff]
    %v33 = vld [vmem:[%s0 + $0x18] sm:$0xff]
    %v34 = vld [vmem:[%s0 + $0x20] sm:$0xff]
    %v35 = vld [vmem:[%s0 + $0x28] sm:$0xff]
    %v36 = vld [vmem:[%s0 + $0x30] sm:$0xff]
    %v37 = vld [vmem:[%s0 + $0x38] sm:$0xff]
    %v38 = vld [vmem:[%s2] sm:$0xff]
    %v39 = vld [vmem:[%s2 + $0x8] sm:$0xff]
    %v40 = vld [vmem:[%s2 + $0x10] sm:$0xff]
    %v41 = vld [vmem:[%s2 + $0x18] sm:$0xff]
    %v42 = vld [vmem:[%s3] sm:$0xff]
    %v43 = vld [vmem:[%s3 + $0x8] sm:$0xff]
    %v44 = vld [vmem:[%s3 + $0x10] sm:$0xff]
    %v45 = vld [vmem:[%s3 + $0x18] sm:$0xff]
    %vm46 = vcmask 261120
    %v48 = vsel %vm46, %v38, 0
    %v51 = vsel %vm46, %v39, 0
    %v54 = vsel %vm46, %v40, 0
    %v57 = vsel %vm46, %v41, 0
    %59 = vmatprep.subr.mxu0 0.0
    %60 = vmatpush1.msra.mxu0 %v30
    %61 = vmatprep.subr.mxu0 0.0
    %62 = vmatpush1.msra.mxu0 %v31
    %63 = vmatprep.subr.mxu0 0.0
    %64 = vmatpush1.msra.mxu0 %v32
    %65 = vmatprep.subr.mxu0 0.0
    %66 = vmatpush1.msra.mxu0 %v33
    %67 = vmatprep.subr.mxu0 0.0
    %68 = vmatpush1.msra.mxu0 0.0
    %69 = vmatprep.subr.mxu0 0.0
    %70 = vmatpush1.msra.mxu0 0.0
    %71 = vmatprep.subr.mxu0 0.0
    %72 = vmatpush1.msra.mxu0 0.0
    %73 = vmatprep.subr.mxu0 0.0
    %74 = vmatpush1.msra.mxu0 0.0
    %75 = vmatprep.subr.mxu0 0.0
    %76 = vmatpush1.msra.mxu0 0.0
    %77 = vmatprep.subr.mxu0 0.0
    %78 = vmatpush1.msra.mxu0 0.0
    %79 = vmatprep.subr.mxu0 0.0
    %80 = vmatpush1.msra.mxu0 0.0
    %81 = vmatprep.subr.mxu0 0.0
    %82 = vmatpush1.msra.mxu0 0.0
    %83 = vmatprep.subr.mxu0 0.0
    %84 = vmatpush1.msra.mxu0 0.0
    %85 = vmatprep.subr.mxu0 0.0
    %86 = vmatpush1.msra.mxu0 0.0
    %87 = vmatprep.subr.mxu0 0.0
    %88 = vmatpush1.msra.mxu0 0.0
    %89 = vmatprep.subr.mxu0 0.0
    %90 = vmatpush1.msra.mxu0 0.0
    %91 = vmatprep.subr.mxu0 0.0
    %92 = vmatpush1.msra.mxu0 0.0
    %93 = vmatprep.subr.mxu0 0.0
    %94 = vmatpush1.msra.mxu0 0.0
    %95 = vmatprep.subr.mxu0 0.0
    %96 = vmatpush1.msra.mxu0 0.0
    %97 = vmatprep.subr.mxu0 0.0
    %98 = vmatpush1.msra.mxu0 0.0
    %99 = vmatprep.subr.mxu0 0.0
    %100 = vmatpush1.msra.mxu0 0.0
    %101 = vmatprep.subr.mxu0 0.0
    %102 = vmatpush1.msra.mxu0 0.0
    %103 = vmatprep.subr.mxu0 0.0
    %104 = vmatpush1.msra.mxu0 0.0
    %105 = vmatprep.subr.mxu0 0.0
    %106 = vmatpush1.msra.mxu0 0.0
    %107 = vmatprep.subr.mxu0 0.0
    %108 = vmatpush1.msra.mxu0 0.0
    %109 = vmatprep.subr.mxu0 0.0
    %110 = vmatpush1.msra.mxu0 0.0
    %111 = vmatprep.subr.mxu0 0.0
    %112 = vmatpush1.msra.mxu0 0.0
    %113 = vmatprep.subr.mxu0 0.0
    %114 = vmatpush1.msra.mxu0 0.0
    %115 = vmatprep.subr.mxu0 0.0
    %116 = vmatpush1.msra.mxu0 0.0
    %117 = vmatprep.subr.mxu0 0.0
    %118 = vmatpush1.msra.mxu0 0.0
    %119 = vmatprep.subr.mxu0 0.0
    %120 = vmatpush1.msra.mxu0 0.0
    %121 = vmatprep.subr.mxu0 0.0
    %122 = vmatpush1.msra.mxu0 0.0
    %123 = vmatprep.mubr.f32.mxu0 0.0
    %124 = vmatmul.mubr.f32.gmra.mrb[0].mxu0 %v48
    %v125 = vpop.f32.mrb[0].mxu0
    %v126 = vadd.f32 %v42, %v125
    %v127 = vpop.f32.mrb[0].mxu0
    %128 = vmatprep.mubr.f32.mxu0 0.0
    %129 = vmatmul.mubr.f32.gmra.mrb[0].mxu0 %v51
    %v130 = vpop.f32.mrb[0].mxu0
    %v131 = vadd.f32 %v43, %v130
    %v132 = vpop.f32.mrb[0].mxu0
    %133 = vmatprep.mubr.f32.mxu0 0.0
    %134 = vmatmul.mubr.f32.gmra.mrb[0].mxu0 %v54
    %v135 = vpop.f32.mrb[0].mxu0
    %v136 = vadd.f32 %v44, %v135
    %v137 = vpop.f32.mrb[0].mxu0
    %138 = vmatprep.mubr.f32.mxu0 0.0
    %139 = vmatmul.mubr.f32.gmra.mrb[0].mxu0 %v57
    %v140 = vpop.f32.mrb[0].mxu0
    %v141 = vadd.f32 %v45, %v140
    %v142 = vpop.f32.mrb[0].mxu0
    %143 = vdwg.mxu0
    %144 = vmatprep.subr.mxu0 0.0
    %145 = vmatpush1.msra.mxu0 %v34
    %146 = vmatprep.subr.mxu0 0.0
    %147 = vmatpush1.msra.mxu0 %v35
    %148 = vmatprep.subr.mxu0 0.0
    %149 = vmatpush1.msra.mxu0 %v36
    %150 = vmatprep.subr.mxu0 0.0
    %151 = vmatpush1.msra.mxu0 %v37
    %152 = vmatprep.subr.mxu0 0.0
    %153 = vmatpush1.msra.mxu0 0.0
    %154 = vmatprep.subr.mxu0 0.0
    %155 = vmatpush1.msra.mxu0 0.0
    %156 = vmatprep.subr.mxu0 0.0
    %157 = vmatpush1.msra.mxu0 0.0
    %158 = vmatprep.subr.mxu0 0.0
    %159 = vmatpush1.msra.mxu0 0.0
    %160 = vmatprep.subr.mxu0 0.0
    %161 = vmatpush1.msra.mxu0 0.0
    %162 = vmatprep.subr.mxu0 0.0
    %163 = vmatpush1.msra.mxu0 0.0
    %164 = vmatprep.subr.mxu0 0.0
    %165 = vmatpush1.msra.mxu0 0.0
    %166 = vmatprep.subr.mxu0 0.0
    %167 = vmatpush1.msra.mxu0 0.0
    %168 = vmatprep.subr.mxu0 0.0
    %169 = vmatpush1.msra.mxu0 0.0
    %170 = vmatprep.subr.mxu0 0.0
    %171 = vmatpush1.msra.mxu0 0.0
    %172 = vmatprep.subr.mxu0 0.0
    %173 = vmatpush1.msra.mxu0 0.0
    %174 = vmatprep.subr.mxu0 0.0
    %175 = vmatpush1.msra.mxu0 0.0
    %176 = vmatprep.subr.mxu0 0.0
    %177 = vmatpush1.msra.mxu0 0.0
    %178 = vmatprep.subr.mxu0 0.0
    %179 = vmatpush1.msra.mxu0 0.0
    %180 = vmatprep.subr.mxu0 0.0
    %181 = vmatpush1.msra.mxu0 0.0
    %182 = vmatprep.subr.mxu0 0.0
    %183 = vmatpush1.msra.mxu0 0.0
    %184 = vmatprep.subr.mxu0 0.0
    %185 = vmatpush1.msra.mxu0 0.0
    %186 = vmatprep.subr.mxu0 0.0
    %187 = vmatpush1.msra.mxu0 0.0
    %188 = vmatprep.subr.mxu0 0.0
    %189 = vmatpush1.msra.mxu0 0.0
    %190 = vmatprep.subr.mxu0 0.0
    %191 = vmatpush1.msra.mxu0 0.0
    %192 = vmatprep.subr.mxu0 0.0
    %193 = vmatpush1.msra.mxu0 0.0
    %194 = vmatprep.subr.mxu0 0.0
    %195 = vmatpush1.msra.mxu0 0.0
    %196 = vmatprep.subr.mxu0 0.0
    %197 = vmatpush1.msra.mxu0 0.0
    %198 = vmatprep.subr.mxu0 0.0
    %199 = vmatpush1.msra.mxu0 0.0
    %200 = vmatprep.subr.mxu0 0.0
    %201 = vmatpush1.msra.mxu0 0.0
    %202 = vmatprep.subr.mxu0 0.0
    %203 = vmatpush1.msra.mxu0 0.0
    %204 = vmatprep.subr.mxu0 0.0
    %205 = vmatpush1.msra.mxu0 0.0
    %206 = vmatprep.subr.mxu0 0.0
    %207 = vmatpush1.msra.mxu0 0.0
    %208 = vmatprep.mubr.f32.mxu0 0.0
    %209 = vmatmul.mubr.f32.gmra.mrb[0].mxu0 %v48
    %v210 = vpop.f32.mrb[0].mxu0
    %v211 = vadd.f32 %v42, %v210
    %v212 = vpop.f32.mrb[0].mxu0
    %213 = vmatprep.mubr.f32.mxu0 0.0
    %214 = vmatmul.mubr.f32.gmra.mrb[0].mxu0 %v51
    %v215 = vpop.f32.mrb[0].mxu0
    %v216 = vadd.f32 %v43, %v215
    %v217 = vpop.f32.mrb[0].mxu0
    %218 = vmatprep.mubr.f32.mxu0 0.0
    %219 = vmatmul.mubr.f32.gmra.mrb[0].mxu0 %v54
    %v220 = vpop.f32.mrb[0].mxu0
    %v221 = vadd.f32 %v44, %v220
    %v222 = vpop.f32.mrb[0].mxu0
    %223 = vmatprep.mubr.f32.mxu0 0.0
    %224 = vmatmul.mubr.f32.gmra.mrb[0].mxu0 %v57
    %v225 = vpop.f32.mrb[0].mxu0
    %v226 = vadd.f32 %v45, %v225
    %v227 = vpop.f32.mrb[0].mxu0
    %228 = vdwg.mxu0
    %v229 = vld [vmem:[%s4] sm:$0xff]
    %v230 = vld [vmem:[%s4 + $0x8] sm:$0xff]
    %v231 = vld [vmem:[%s4 + $0x10] sm:$0xff]
    %v232 = vld [vmem:[%s4 + $0x18] sm:$0xff]
    %v233 = vld [vmem:[%s4 + $0x20] sm:$0xff]
    %v234 = vld [vmem:[%s4 + $0x28] sm:$0xff]
    %v235 = vld [vmem:[%s4 + $0x30] sm:$0xff]
    %v236 = vld [vmem:[%s4 + $0x38] sm:$0xff]
    %v237 = vld [vmem:[%s1] sm:$0xff]
    %v238 = vld [vmem:[%s1 + $0x8] sm:$0xff]
    %v239 = vld [vmem:[%s1 + $0x10] sm:$0xff]
    %v240 = vld [vmem:[%s1 + $0x18] sm:$0xff]
    %v241 = vld [vmem:[%s5] sm:$0xff]
    %v242 = vld [vmem:[%s5 + $0x8] sm:$0xff]
    %v243 = vld [vmem:[%s5 + $0x10] sm:$0xff]
    %v244 = vld [vmem:[%s5 + $0x18] sm:$0xff]
    %v245 = vld [vmem:[%s5 + $0x20] sm:$0xff]
    %v246 = vld [vmem:[%s5 + $0x28] sm:$0xff]
    %v247 = vld [vmem:[%s5 + $0x30] sm:$0xff]
    %v248 = vld [vmem:[%s5 + $0x38] sm:$0xff]
    %vm249 = vcmask 130048
    %v251 = vsel %vm249, %v229, 0
    %v254 = vsel %vm249, %v230, 0
    %v257 = vsel %vm249, %v231, 0
    %v260 = vsel %vm249, %v232, 0
    %v263 = vsel %vm249, %v233, 0
    %v266 = vsel %vm249, %v234, 0
    %v269 = vsel %vm249, %v235, 0
    %v272 = vsel %vm249, %v236, 0
    %274 = vmatprep.subr.mxu0 0.0
    %275 = vmatpush1.msra.mxu0 %v237
    %276 = vmatprep.subr.mxu0 0.0
    %277 = vmatpush1.msra.mxu0 %v238
    %278 = vmatprep.subr.mxu0 0.0
    %279 = vmatpush1.msra.mxu0 0.0
    %280 = vmatprep.subr.mxu0 0.0
    %281 = vmatpush1.msra.mxu0 0.0
    %282 = vmatprep.subr.mxu0 0.0
    %283 = vmatpush1.msra.mxu0 0.0
    %284 = vmatprep.subr.mxu0 0.0
    %285 = vmatpush1.msra.mxu0 0.0
    %286 = vmatprep.subr.mxu0 0.0
    %287 = vmatpush1.msra.mxu0 0.0
    %288 = vmatprep.subr.mxu0 0.0
    %289 = vmatpush1.msra.mxu0 0.0
    %290 = vmatprep.subr.mxu0 0.0
    %291 = vmatpush1.msra.mxu0 0.0
    %292 = vmatprep.subr.mxu0 0.0
    %293 = vmatpush1.msra.mxu0 0.0
    %294 = vmatprep.subr.mxu0 0.0
    %295 = vmatpush1.msra.mxu0 0.0
    %296 = vmatprep.subr.mxu0 0.0
    %297 = vmatpush1.msra.mxu0 0.0
    %298 = vmatprep.subr.mxu0 0.0
    %299 = vmatpush1.msra.mxu0 0.0
    %300 = vmatprep.subr.mxu0 0.0
    %301 = vmatpush1.msra.mxu0 0.0
    %302 = vmatprep.subr.mxu0 0.0
    %303 = vmatpush1.msra.mxu0 0.0
    %304 = vmatprep.subr.mxu0 0.0
    %305 = vmatpush1.msra.mxu0 0.0
    %306 = vmatprep.subr.mxu0 0.0
    %307 = vmatpush1.msra.mxu0 0.0
    %308 = vmatprep.subr.mxu0 0.0
    %309 = vmatpush1.msra.mxu0 0.0
    %310 = vmatprep.subr.mxu0 0.0
    %311 = vmatpush1.msra.mxu0 0.0
    %312 = vmatprep.subr.mxu0 0.0
    %313 = vmatpush1.msra.mxu0 0.0
    %314 = vmatprep.subr.mxu0 0.0
    %315 = vmatpush1.msra.mxu0 0.0
    %316 = vmatprep.subr.mxu0 0.0
    %317 = vmatpush1.msra.mxu0 0.0
    %318 = vmatprep.subr.mxu0 0.0
    %319 = vmatpush1.msra.mxu0 0.0
    %320 = vmatprep.subr.mxu0 0.0
    %321 = vmatpush1.msra.mxu0 0.0
    %322 = vmatprep.subr.mxu0 0.0
    %323 = vmatpush1.msra.mxu0 0.0
    %324 = vmatprep.subr.mxu0 0.0
    %325 = vmatpush1.msra.mxu0 0.0
    %326 = vmatprep.subr.mxu0 0.0
    %327 = vmatpush1.msra.mxu0 0.0
    %328 = vmatprep.subr.mxu0 0.0
    %329 = vmatpush1.msra.mxu0 0.0
    %330 = vmatprep.subr.mxu0 0.0
    %331 = vmatpush1.msra.mxu0 0.0
    %332 = vmatprep.subr.mxu0 0.0
    %333 = vmatpush1.msra.mxu0 0.0
    %334 = vmatprep.subr.mxu0 0.0
    %335 = vmatpush1.msra.mxu0 0.0
    %336 = vmatprep.subr.mxu0 0.0
    %337 = vmatpush1.msra.mxu0 0.0
    %338 = vmatprep.mubr.f32.mxu0 0.0
    %339 = vmatmul.mubr.f32.gmra.mrb[0].mxu0 %v251
    %v340 = vpop.f32.mrb[0].mxu0
    %v341 = vadd.f32 %v241, %v340
    %v342 = vpop.f32.mrb[0].mxu0
    %343 = vmatprep.mubr.f32.mxu0 0.0
    %344 = vmatmul.mubr.f32.gmra.mrb[0].mxu0 %v254
    %v345 = vpop.f32.mrb[0].mxu0
    %v346 = vadd.f32 %v242, %v345
    %v347 = vpop.f32.mrb[0].mxu0
    %348 = vmatprep.mubr.f32.mxu0 0.0
    %349 = vmatmul.mubr.f32.gmra.mrb[0].mxu0 %v257
    %v350 = vpop.f32.mrb[0].mxu0
    %v351 = vadd.f32 %v243, %v350
    %v352 = vpop.f32.mrb[0].mxu0
    %353 = vmatprep.mubr.f32.mxu0 0.0
    %354 = vmatmul.mubr.f32.gmra.mrb[0].mxu0 %v260
    %v355 = vpop.f32.mrb[0].mxu0
    %v356 = vadd.f32 %v244, %v355
    %v357 = vpop.f32.mrb[0].mxu0
    %358 = vmatprep.mubr.f32.mxu0 0.0
    %359 = vmatmul.mubr.f32.gmra.mrb[0].mxu0 %v263
    %v360 = vpop.f32.mrb[0].mxu0
    %v361 = vadd.f32 %v245, %v360
    %v362 = vpop.f32.mrb[0].mxu0
    %363 = vmatprep.mubr.f32.mxu0 0.0
    %364 = vmatmul.mubr.f32.gmra.mrb[0].mxu0 %v266
    %v365 = vpop.f32.mrb[0].mxu0
    %v366 = vadd.f32 %v246, %v365
    %v367 = vpop.f32.mrb[0].mxu0
    %368 = vmatprep.mubr.f32.mxu0 0.0
    %369 = vmatmul.mubr.f32.gmra.mrb[0].mxu0 %v269
    %v370 = vpop.f32.mrb[0].mxu0
    %v371 = vadd.f32 %v247, %v370
    %v372 = vpop.f32.mrb[0].mxu0
    %373 = vmatprep.mubr.f32.mxu0 0.0
    %374 = vmatmul.mubr.f32.gmra.mrb[0].mxu0 %v272
    %v375 = vpop.f32.mrb[0].mxu0
    %v376 = vadd.f32 %v248, %v375
    %v377 = vpop.f32.mrb[0].mxu0
    %378 = vdwg.mxu0
    %379 = vmatprep.subr.mxu0 0.0
    %380 = vmatpush1.msra.mxu0 %v239
    %381 = vmatprep.subr.mxu0 0.0
    %382 = vmatpush1.msra.mxu0 %v240
    %383 = vmatprep.subr.mxu0 0.0
    %384 = vmatpush1.msra.mxu0 0.0
    %385 = vmatprep.subr.mxu0 0.0
    %386 = vmatpush1.msra.mxu0 0.0
    %387 = vmatprep.subr.mxu0 0.0
    %388 = vmatpush1.msra.mxu0 0.0
    %389 = vmatprep.subr.mxu0 0.0
    %390 = vmatpush1.msra.mxu0 0.0
    %391 = vmatprep.subr.mxu0 0.0
    %392 = vmatpush1.msra.mxu0 0.0
    %393 = vmatprep.subr.mxu0 0.0
    %394 = vmatpush1.msra.mxu0 0.0
    %395 = vmatprep.subr.mxu0 0.0
    %396 = vmatpush1.msra.mxu0 0.0
    %397 = vmatprep.subr.mxu0 0.0
    %398 = vmatpush1.msra.mxu0 0.0
    %399 = vmatprep.subr.mxu0 0.0
    %400 = vmatpush1.msra.mxu0 0.0
    %401 = vmatprep.subr.mxu0 0.0
    %402 = vmatpush1.msra.mxu0 0.0
    %403 = vmatprep.subr.mxu0 0.0
    %404 = vmatpush1.msra.mxu0 0.0
    %405 = vmatprep.subr.mxu0 0.0
    %406 = vmatpush1.msra.mxu0 0.0
    %407 = vmatprep.subr.mxu0 0.0
    %408 = vmatpush1.msra.mxu0 0.0
    %409 = vmatprep.subr.mxu0 0.0
    %410 = vmatpush1.msra.mxu0 0.0
    %411 = vmatprep.subr.mxu0 0.0
    %412 = vmatpush1.msra.mxu0 0.0
    %413 = vmatprep.subr.mxu0 0.0
    %414 = vmatpush1.msra.mxu0 0.0
    %415 = vmatprep.subr.mxu0 0.0
    %416 = vmatpush1.msra.mxu0 0.0
    %417 = vmatprep.subr.mxu0 0.0
    %418 = vmatpush1.msra.mxu0 0.0
    %419 = vmatprep.subr.mxu0 0.0
    %420 = vmatpush1.msra.mxu0 0.0
    %421 = vmatprep.subr.mxu0 0.0
    %422 = vmatpush1.msra.mxu0 0.0
    %423 = vmatprep.subr.mxu0 0.0
    %424 = vmatpush1.msra.mxu0 0.0
    %425 = vmatprep.subr.mxu0 0.0
    %426 = vmatpush1.msra.mxu0 0.0
    %427 = vmatprep.subr.mxu0 0.0
    %428 = vmatpush1.msra.mxu0 0.0
    %429 = vmatprep.subr.mxu0 0.0
    %430 = vmatpush1.msra.mxu0 0.0
    %431 = vmatprep.subr.mxu0 0.0
    %432 = vmatpush1.msra.mxu0 0.0
    %433 = vmatprep.subr.mxu0 0.0
    %434 = vmatpush1.msra.mxu0 0.0
    %435 = vmatprep.subr.mxu0 0.0
    %436 = vmatpush1.msra.mxu0 0.0
    %437 = vmatprep.subr.mxu0 0.0
    %438 = vmatpush1.msra.mxu0 0.0
    %439 = vmatprep.subr.mxu0 0.0
    %440 = vmatpush1.msra.mxu0 0.0
    %441 = vmatprep.subr.mxu0 0.0
    %442 = vmatpush1.msra.mxu0 0.0
    %443 = vmatprep.mubr.f32.mxu0 0.0
    %444 = vmatmul.mubr.f32.gmra.mrb[0].mxu0 %v251
    %v445 = vpop.f32.mrb[0].mxu0
    %v446 = vadd.f32 %v241, %v445
    %v447 = vpop.f32.mrb[0].mxu0
    %448 = vmatprep.mubr.f32.mxu0 0.0
    %449 = vmatmul.mubr.f32.gmra.mrb[0].mxu0 %v254
    %v450 = vpop.f32.mrb[0].mxu0
    %v451 = vadd.f32 %v242, %v450
    %v452 = vpop.f32.mrb[0].mxu0
    %453 = vmatprep.mubr.f32.mxu0 0.0
    %454 = vmatmul.mubr.f32.gmra.mrb[0].mxu0 %v257
    %v455 = vpop.f32.mrb[0].mxu0
    %v456 = vadd.f32 %v243, %v455
    %v457 = vpop.f32.mrb[0].mxu0
    %458 = vmatprep.mubr.f32.mxu0 0.0
    %459 = vmatmul.mubr.f32.gmra.mrb[0].mxu0 %v260
    %v460 = vpop.f32.mrb[0].mxu0
    %v461 = vadd.f32 %v244, %v460
    %v462 = vpop.f32.mrb[0].mxu0
    %463 = vmatprep.mubr.f32.mxu0 0.0
    %464 = vmatmul.mubr.f32.gmra.mrb[0].mxu0 %v263
    %v465 = vpop.f32.mrb[0].mxu0
    %v466 = vadd.f32 %v245, %v465
    %v467 = vpop.f32.mrb[0].mxu0
    %468 = vmatprep.mubr.f32.mxu0 0.0
    %469 = vmatmul.mubr.f32.gmra.mrb[0].mxu0 %v266
    %v470 = vpop.f32.mrb[0].mxu0
    %v471 = vadd.f32 %v246, %v470
    %v472 = vpop.f32.mrb[0].mxu0
    %473 = vmatprep.mubr.f32.mxu0 0.0
    %474 = vmatmul.mubr.f32.gmra.mrb[0].mxu0 %v269
    %v475 = vpop.f32.mrb[0].mxu0
    %v476 = vadd.f32 %v247, %v475
    %v477 = vpop.f32.mrb[0].mxu0
    %478 = vmatprep.mubr.f32.mxu0 0.0
    %479 = vmatmul.mubr.f32.gmra.mrb[0].mxu0 %v272
    %v480 = vpop.f32.mrb[0].mxu0
    %v481 = vadd.f32 %v248, %v480
    %v482 = vpop.f32.mrb[0].mxu0
    %483 = vdwg.mxu0
    %484 = vxpose.xlu0.b32.start [1/16] %v341, 128
    %485 = vxpose.xlu0.b32.cont [2/16] 0.0, 128
    %486 = vxpose.xlu0.b32.cont [3/16] 0.0, 128
    %487 = vxpose.xlu0.b32.cont [4/16] 0.0, 128
    %488 = vxpose.xlu0.b32.cont [5/16] 0.0, 128
    %489 = vxpose.xlu0.b32.cont [6/16] 0.0, 128
    %490 = vxpose.xlu0.b32.cont [7/16] 0.0, 128
    %491 = vxpose.xlu0.b32.cont [8/16] 0.0, 128
    %492 = vxpose.xlu0.b32.cont [9/16] 0.0, 128
    %493 = vxpose.xlu0.b32.cont [10/16] 0.0, 128
    %494 = vxpose.xlu0.b32.cont [11/16] 0.0, 128
    %495 = vxpose.xlu0.b32.cont [12/16] 0.0, 128
    %496 = vxpose.xlu0.b32.cont [13/16] 0.0, 128
    %497 = vxpose.xlu0.b32.cont [14/16] 0.0, 128
    %498 = vxpose.xlu0.b32.cont [15/16] 0.0, 128
    %499 = vxpose.xlu0.b32.end [16/16] 0.0, 128
    %v500 = vpop.trf.xlu0
    %v501 = vpop.trf.xlu0
    %v502 = vpop.trf.xlu0
    %v503 = vpop.trf.xlu0
    %v504 = vpop.trf.xlu0
    %v505 = vpop.trf.xlu0
    %v506 = vpop.trf.xlu0
    %v507 = vpop.trf.xlu0
    %v508 = vpop.trf.xlu0
    %v509 = vpop.trf.xlu0
    %v510 = vpop.trf.xlu0
    %v511 = vpop.trf.xlu0
    %v512 = vpop.trf.xlu0
    %v513 = vpop.trf.xlu0
    %v514 = vpop.trf.xlu0
    %v515 = vpop.trf.xlu0
    %vm516 = vcmask 64512
    %v518 = vsel %vm516, %v500, 0
    %v521 = vsel %vm516, %v501, 0
    %523 = vmatprep.subr.mxu0 0.0
    %524 = vmatpush1.msra.mxu0 %v126
    %525 = vmatprep.subr.mxu0 0.0
    %526 = vmatpush1.msra.mxu0 0.0
    %527 = vmatprep.subr.mxu0 0.0
    %528 = vmatpush1.msra.mxu0 0.0
    %529 = vmatprep.subr.mxu0 0.0
    %530 = vmatpush1.msra.mxu0 0.0
    %531 = vmatprep.subr.mxu0 0.0
    %532 = vmatpush1.msra.mxu0 0.0
    %533 = vmatprep.subr.mxu0 0.0
    %534 = vmatpush1.msra.mxu0 0.0
    %535 = vmatprep.subr.mxu0 0.0
    %536 = vmatpush1.msra.mxu0 0.0
    %537 = vmatprep.subr.mxu0 0.0
    %538 = vmatpush1.msra.mxu0 0.0
    %539 = vmatprep.subr.mxu0 0.0
    %540 = vmatpush1.msra.mxu0 0.0
    %541 = vmatprep.subr.mxu0 0.0
    %542 = vmatpush1.msra.mxu0 0.0
    %543 = vmatprep.subr.mxu0 0.0
    %544 = vmatpush1.msra.mxu0 0.0
    %545 = vmatprep.subr.mxu0 0.0
    %546 = vmatpush1.msra.mxu0 0.0
    %547 = vmatprep.subr.mxu0 0.0
    %548 = vmatpush1.msra.mxu0 0.0
    %549 = vmatprep.subr.mxu0 0.0
    %550 = vmatpush1.msra.mxu0 0.0
    %551 = vmatprep.subr.mxu0 0.0
    %552 = vmatpush1.msra.mxu0 0.0
    %553 = vmatprep.subr.mxu0 0.0
    %554 = vmatpush1.msra.mxu0 0.0
    %555 = vmatprep.subr.mxu0 0.0
    %556 = vmatpush1.msra.mxu0 0.0
    %557 = vmatprep.subr.mxu0 0.0
    %558 = vmatpush1.msra.mxu0 0.0
    %559 = vmatprep.subr.mxu0 0.0
    %560 = vmatpush1.msra.mxu0 0.0
    %561 = vmatprep.subr.mxu0 0.0
    %562 = vmatpush1.msra.mxu0 0.0
    %563 = vmatprep.subr.mxu0 0.0
    %564 = vmatpush1.msra.mxu0 0.0
    %565 = vmatprep.subr.mxu0 0.0
    %566 = vmatpush1.msra.mxu0 0.0
    %567 = vmatprep.subr.mxu0 0.0
    %568 = vmatpush1.msra.mxu0 0.0
    %569 = vmatprep.subr.mxu0 0.0
    %570 = vmatpush1.msra.mxu0 0.0
    %571 = vmatprep.subr.mxu0 0.0
    %572 = vmatpush1.msra.mxu0 0.0
    %573 = vmatprep.subr.mxu0 0.0
    %574 = vmatpush1.msra.mxu0 0.0
    %575 = vmatprep.subr.mxu0 0.0
    %576 = vmatpush1.msra.mxu0 0.0
    %577 = vmatprep.subr.mxu0 0.0
    %578 = vmatpush1.msra.mxu0 0.0
    %579 = vmatprep.subr.mxu0 0.0
    %580 = vmatpush1.msra.mxu0 0.0
    %581 = vmatprep.subr.mxu0 0.0
    %582 = vmatpush1.msra.mxu0 0.0
    %583 = vmatprep.subr.mxu0 0.0
    %584 = vmatpush1.msra.mxu0 0.0
    %585 = vmatprep.subr.mxu0 0.0
    %586 = vmatpush1.msra.mxu0 0.0
    %587 = vmatprep.mubr.f32.mxu0 0.0
    %588 = vmatmul.mubr.f32.gmra.mrb[0].mxu0 %v518
    %v589 = vpop.f32.mrb[0].mxu0
    %v590 = vadd.f32 0.0, %v589
    %v591 = vpop.f32.mrb[0].mxu0
    %592 = vmatprep.mubr.f32.mxu0 0.0
    %593 = vmatmul.mubr.f32.gmra.mrb[0].mxu0 %v521
    %v594 = vpop.f32.mrb[0].mxu0
    %v595 = vadd.f32 0.0, %v594
    %v596 = vpop.f32.mrb[0].mxu0
    %597 = vdwg.mxu0
    %598 = vxpose.xlu0.b32.start [1/16] %v346, 128
    %599 = vxpose.xlu0.b32.cont [2/16] 0.0, 128
    %600 = vxpose.xlu0.b32.cont [3/16] 0.0, 128
    %601 = vxpose.xlu0.b32.cont [4/16] 0.0, 128
    %602 = vxpose.xlu0.b32.cont [5/16] 0.0, 128
    %603 = vxpose.xlu0.b32.cont [6/16] 0.0, 128
    %604 = vxpose.xlu0.b32.cont [7/16] 0.0, 128
    %605 = vxpose.xlu0.b32.cont [8/16] 0.0, 128
    %606 = vxpose.xlu0.b32.cont [9/16] 0.0, 128
    %607 = vxpose.xlu0.b32.cont [10/16] 0.0, 128
    %608 = vxpose.xlu0.b32.cont [11/16] 0.0, 128
    %609 = vxpose.xlu0.b32.cont [12/16] 0.0, 128
    %610 = vxpose.xlu0.b32.cont [13/16] 0.0, 128
    %611 = vxpose.xlu0.b32.cont [14/16] 0.0, 128
    %612 = vxpose.xlu0.b32.cont [15/16] 0.0, 128
    %613 = vxpose.xlu0.b32.end [16/16] 0.0, 128
    %v614 = vpop.trf.xlu0
    %v615 = vpop.trf.xlu0
    %v616 = vpop.trf.xlu0
    %v617 = vpop.trf.xlu0
    %v618 = vpop.trf.xlu0
    %v619 = vpop.trf.xlu0
    %v620 = vpop.trf.xlu0
    %v621 = vpop.trf.xlu0
    %v622 = vpop.trf.xlu0
    %v623 = vpop.trf.xlu0
    %v624 = vpop.trf.xlu0
    %v625 = vpop.trf.xlu0
    %v626 = vpop.trf.xlu0
    %v627 = vpop.trf.xlu0
    %v628 = vpop.trf.xlu0
    %v629 = vpop.trf.xlu0
    %v631 = vsel %vm516, %v614, 0
    %v634 = vsel %vm516, %v615, 0
    %636 = vmatprep.subr.mxu0 0.0
    %637 = vmatpush1.msra.mxu0 %v131
    %638 = vmatprep.subr.mxu0 0.0
    %639 = vmatpush1.msra.mxu0 0.0
    %640 = vmatprep.subr.mxu0 0.0
    %641 = vmatpush1.msra.mxu0 0.0
    %642 = vmatprep.subr.mxu0 0.0
    %643 = vmatpush1.msra.mxu0 0.0
    %644 = vmatprep.subr.mxu0 0.0
    %645 = vmatpush1.msra.mxu0 0.0
    %646 = vmatprep.subr.mxu0 0.0
    %647 = vmatpush1.msra.mxu0 0.0
    %648 = vmatprep.subr.mxu0 0.0
    %649 = vmatpush1.msra.mxu0 0.0
    %650 = vmatprep.subr.mxu0 0.0
    %651 = vmatpush1.msra.mxu0 0.0
    %652 = vmatprep.subr.mxu0 0.0
    %653 = vmatpush1.msra.mxu0 0.0
    %654 = vmatprep.subr.mxu0 0.0
    %655 = vmatpush1.msra.mxu0 0.0
    %656 = vmatprep.subr.mxu0 0.0
    %657 = vmatpush1.msra.mxu0 0.0
    %658 = vmatprep.subr.mxu0 0.0
    %659 = vmatpush1.msra.mxu0 0.0
    %660 = vmatprep.subr.mxu0 0.0
    %661 = vmatpush1.msra.mxu0 0.0
    %662 = vmatprep.subr.mxu0 0.0
    %663 = vmatpush1.msra.mxu0 0.0
    %664 = vmatprep.subr.mxu0 0.0
    %665 = vmatpush1.msra.mxu0 0.0
    %666 = vmatprep.subr.mxu0 0.0
    %667 = vmatpush1.msra.mxu0 0.0
    %668 = vmatprep.subr.mxu0 0.0
    %669 = vmatpush1.msra.mxu0 0.0
    %670 = vmatprep.subr.mxu0 0.0
    %671 = vmatpush1.msra.mxu0 0.0
    %672 = vmatprep.subr.mxu0 0.0
    %673 = vmatpush1.msra.mxu0 0.0
    %674 = vmatprep.subr.mxu0 0.0
    %675 = vmatpush1.msra.mxu0 0.0
    %676 = vmatprep.subr.mxu0 0.0
    %677 = vmatpush1.msra.mxu0 0.0
    %678 = vmatprep.subr.mxu0 0.0
    %679 = vmatpush1.msra.mxu0 0.0
    %680 = vmatprep.subr.mxu0 0.0
    %681 = vmatpush1.msra.mxu0 0.0
    %682 = vmatprep.subr.mxu0 0.0
    %683 = vmatpush1.msra.mxu0 0.0
    %684 = vmatprep.subr.mxu0 0.0
    %685 = vmatpush1.msra.mxu0 0.0
    %686 = vmatprep.subr.mxu0 0.0
    %687 = vmatpush1.msra.mxu0 0.0
    %688 = vmatprep.subr.mxu0 0.0
    %689 = vmatpush1.msra.mxu0 0.0
    %690 = vmatprep.subr.mxu0 0.0
    %691 = vmatpush1.msra.mxu0 0.0
    %692 = vmatprep.subr.mxu0 0.0
    %693 = vmatpush1.msra.mxu0 0.0
    %694 = vmatprep.subr.mxu0 0.0
    %695 = vmatpush1.msra.mxu0 0.0
    %696 = vmatprep.subr.mxu0 0.0
    %697 = vmatpush1.msra.mxu0 0.0
    %698 = vmatprep.subr.mxu0 0.0
    %699 = vmatpush1.msra.mxu0 0.0
    %700 = vmatprep.mubr.f32.mxu0 0.0
    %701 = vmatmul.mubr.f32.gmra.mrb[0].mxu0 %v631
    %v702 = vpop.f32.mrb[0].mxu0
    %v703 = vadd.f32 0.0, %v702
    %v704 = vpop.f32.mrb[0].mxu0
    %705 = vmatprep.mubr.f32.mxu0 0.0
    %706 = vmatmul.mubr.f32.gmra.mrb[0].mxu0 %v634
    %v707 = vpop.f32.mrb[0].mxu0
    %v708 = vadd.f32 0.0, %v707
    %v709 = vpop.f32.mrb[0].mxu0
    %710 = vdwg.mxu0
    %711 = vxpose.xlu0.b32.start [1/16] %v351, 128
    %712 = vxpose.xlu0.b32.cont [2/16] 0.0, 128
    %713 = vxpose.xlu0.b32.cont [3/16] 0.0, 128
    %714 = vxpose.xlu0.b32.cont [4/16] 0.0, 128
    %715 = vxpose.xlu0.b32.cont [5/16] 0.0, 128
    %716 = vxpose.xlu0.b32.cont [6/16] 0.0, 128
    %717 = vxpose.xlu0.b32.cont [7/16] 0.0, 128
    %718 = vxpose.xlu0.b32.cont [8/16] 0.0, 128
    %719 = vxpose.xlu0.b32.cont [9/16] 0.0, 128
    %720 = vxpose.xlu0.b32.cont [10/16] 0.0, 128
    %721 = vxpose.xlu0.b32.cont [11/16] 0.0, 128
    %722 = vxpose.xlu0.b32.cont [12/16] 0.0, 128
    %723 = vxpose.xlu0.b32.cont [13/16] 0.0, 128
    %724 = vxpose.xlu0.b32.cont [14/16] 0.0, 128
    %725 = vxpose.xlu0.b32.cont [15/16] 0.0, 128
    %726 = vxpose.xlu0.b32.end [16/16] 0.0, 128
    %v727 = vpop.trf.xlu0
    %v728 = vpop.trf.xlu0
    %v729 = vpop.trf.xlu0
    %v730 = vpop.trf.xlu0
    %v731 = vpop.trf.xlu0
    %v732 = vpop.trf.xlu0
    %v733 = vpop.trf.xlu0
    %v734 = vpop.trf.xlu0
    %v735 = vpop.trf.xlu0
    %v736 = vpop.trf.xlu0
    %v737 = vpop.trf.xlu0
    %v738 = vpop.trf.xlu0
    %v739 = vpop.trf.xlu0
    %v740 = vpop.trf.xlu0
    %v741 = vpop.trf.xlu0
    %v742 = vpop.trf.xlu0
    %v744 = vsel %vm516, %v727, 0
    %v747 = vsel %vm516, %v728, 0
    %749 = vmatprep.subr.mxu0 0.0
    %750 = vmatpush1.msra.mxu0 %v136
    %751 = vmatprep.subr.mxu0 0.0
    %752 = vmatpush1.msra.mxu0 0.0
    %753 = vmatprep.subr.mxu0 0.0
    %754 = vmatpush1.msra.mxu0 0.0
    %755 = vmatprep.subr.mxu0 0.0
    %756 = vmatpush1.msra.mxu0 0.0
    %757 = vmatprep.subr.mxu0 0.0
    %758 = vmatpush1.msra.mxu0 0.0
    %759 = vmatprep.subr.mxu0 0.0
    %760 = vmatpush1.msra.mxu0 0.0
    %761 = vmatprep.subr.mxu0 0.0
    %762 = vmatpush1.msra.mxu0 0.0
    %763 = vmatprep.subr.mxu0 0.0
    %764 = vmatpush1.msra.mxu0 0.0
    %765 = vmatprep.subr.mxu0 0.0
    %766 = vmatpush1.msra.mxu0 0.0
    %767 = vmatprep.subr.mxu0 0.0
    %768 = vmatpush1.msra.mxu0 0.0
    %769 = vmatprep.subr.mxu0 0.0
    %770 = vmatpush1.msra.mxu0 0.0
    %771 = vmatprep.subr.mxu0 0.0
    %772 = vmatpush1.msra.mxu0 0.0
    %773 = vmatprep.subr.mxu0 0.0
    %774 = vmatpush1.msra.mxu0 0.0
    %775 = vmatprep.subr.mxu0 0.0
    %776 = vmatpush1.msra.mxu0 0.0
    %777 = vmatprep.subr.mxu0 0.0
    %778 = vmatpush1.msra.mxu0 0.0
    %779 = vmatprep.subr.mxu0 0.0
    %780 = vmatpush1.msra.mxu0 0.0
    %781 = vmatprep.subr.mxu0 0.0
    %782 = vmatpush1.msra.mxu0 0.0
    %783 = vmatprep.subr.mxu0 0.0
    %784 = vmatpush1.msra.mxu0 0.0
    %785 = vmatprep.subr.mxu0 0.0
    %786 = vmatpush1.msra.mxu0 0.0
    %787 = vmatprep.subr.mxu0 0.0
    %788 = vmatpush1.msra.mxu0 0.0
    %789 = vmatprep.subr.mxu0 0.0
    %790 = vmatpush1.msra.mxu0 0.0
    %791 = vmatprep.subr.mxu0 0.0
    %792 = vmatpush1.msra.mxu0 0.0
    %793 = vmatprep.subr.mxu0 0.0
    %794 = vmatpush1.msra.mxu0 0.0
    %795 = vmatprep.subr.mxu0 0.0
    %796 = vmatpush1.msra.mxu0 0.0
    %797 = vmatprep.subr.mxu0 0.0
    %798 = vmatpush1.msra.mxu0 0.0
    %799 = vmatprep.subr.mxu0 0.0
    %800 = vmatpush1.msra.mxu0 0.0
    %801 = vmatprep.subr.mxu0 0.0
    %802 = vmatpush1.msra.mxu0 0.0
    %803 = vmatprep.subr.mxu0 0.0
    %804 = vmatpush1.msra.mxu0 0.0
    %805 = vmatprep.subr.mxu0 0.0
    %806 = vmatpush1.msra.mxu0 0.0
    %807 = vmatprep.subr.mxu0 0.0
    %808 = vmatpush1.msra.mxu0 0.0
    %809 = vmatprep.subr.mxu0 0.0
    %810 = vmatpush1.msra.mxu0 0.0
    %811 = vmatprep.subr.mxu0 0.0
    %812 = vmatpush1.msra.mxu0 0.0
    %813 = vmatprep.mubr.f32.mxu0 0.0
    %814 = vmatmul.mubr.f32.gmra.mrb[0].mxu0 %v744
    %v815 = vpop.f32.mrb[0].mxu0
    %v816 = vadd.f32 0.0, %v815
    %v817 = vpop.f32.mrb[0].mxu0
    %818 = vmatprep.mubr.f32.mxu0 0.0
    %819 = vmatmul.mubr.f32.gmra.mrb[0].mxu0 %v747
    %v820 = vpop.f32.mrb[0].mxu0
    %v821 = vadd.f32 0.0, %v820
    %v822 = vpop.f32.mrb[0].mxu0
    %823 = vdwg.mxu0
    %824 = vxpose.xlu0.b32.start [1/16] %v356, 128
    %825 = vxpose.xlu0.b32.cont [2/16] 0.0, 128
    %826 = vxpose.xlu0.b32.cont [3/16] 0.0, 128
    %827 = vxpose.xlu0.b32.cont [4/16] 0.0, 128
    %828 = vxpose.xlu0.b32.cont [5/16] 0.0, 128
    %829 = vxpose.xlu0.b32.cont [6/16] 0.0, 128
    %830 = vxpose.xlu0.b32.cont [7/16] 0.0, 128
    %831 = vxpose.xlu0.b32.cont [8/16] 0.0, 128
    %832 = vxpose.xlu0.b32.cont [9/16] 0.0, 128
    %833 = vxpose.xlu0.b32.cont [10/16] 0.0, 128
    %834 = vxpose.xlu0.b32.cont [11/16] 0.0, 128
    %835 = vxpose.xlu0.b32.cont [12/16] 0.0, 128
    %836 = vxpose.xlu0.b32.cont [13/16] 0.0, 128
    %837 = vxpose.xlu0.b32.cont [14/16] 0.0, 128
    %838 = vxpose.xlu0.b32.cont [15/16] 0.0, 128
    %839 = vxpose.xlu0.b32.end [16/16] 0.0, 128
    %v840 = vpop.trf.xlu0
    %v841 = vpop.trf.xlu0
    %v842 = vpop.trf.xlu0
    %v843 = vpop.trf.xlu0
    %v844 = vpop.trf.xlu0
    %v845 = vpop.trf.xlu0
    %v846 = vpop.trf.xlu0
    %v847 = vpop.trf.xlu0
    %v848 = vpop.trf.xlu0
    %v849 = vpop.trf.xlu0
    %v850 = vpop.trf.xlu0
    %v851 = vpop.trf.xlu0
    %v852 = vpop.trf.xlu0
    %v853 = vpop.trf.xlu0
    %v854 = vpop.trf.xlu0
    %v855 = vpop.trf.xlu0
    %v857 = vsel %vm516, %v840, 0
    %v860 = vsel %vm516, %v841, 0
    %862 = vmatprep.subr.mxu0 0.0
    %863 = vmatpush1.msra.mxu0 %v141
    %864 = vmatprep.subr.mxu0 0.0
    %865 = vmatpush1.msra.mxu0 0.0
    %866 = vmatprep.subr.mxu0 0.0
    %867 = vmatpush1.msra.mxu0 0.0
    %868 = vmatprep.subr.mxu0 0.0
    %869 = vmatpush1.msra.mxu0 0.0
    %870 = vmatprep.subr.mxu0 0.0
    %871 = vmatpush1.msra.mxu0 0.0
    %872 = vmatprep.subr.mxu0 0.0
    %873 = vmatpush1.msra.mxu0 0.0
    %874 = vmatprep.subr.mxu0 0.0
    %875 = vmatpush1.msra.mxu0 0.0
    %876 = vmatprep.subr.mxu0 0.0
    %877 = vmatpush1.msra.mxu0 0.0
    %878 = vmatprep.subr.mxu0 0.0
    %879 = vmatpush1.msra.mxu0 0.0
    %880 = vmatprep.subr.mxu0 0.0
    %881 = vmatpush1.msra.mxu0 0.0
    %882 = vmatprep.subr.mxu0 0.0
    %883 = vmatpush1.msra.mxu0 0.0
    %884 = vmatprep.subr.mxu0 0.0
    %885 = vmatpush1.msra.mxu0 0.0
    %886 = vmatprep.subr.mxu0 0.0
    %887 = vmatpush1.msra.mxu0 0.0
    %888 = vmatprep.subr.mxu0 0.0
    %889 = vmatpush1.msra.mxu0 0.0
    %890 = vmatprep.subr.mxu0 0.0
    %891 = vmatpush1.msra.mxu0 0.0
    %892 = vmatprep.subr.mxu0 0.0
    %893 = vmatpush1.msra.mxu0 0.0
    %894 = vmatprep.subr.mxu0 0.0
    %895 = vmatpush1.msra.mxu0 0.0
    %896 = vmatprep.subr.mxu0 0.0
    %897 = vmatpush1.msra.mxu0 0.0
    %898 = vmatprep.subr.mxu0 0.0
    %899 = vmatpush1.msra.mxu0 0.0
    %900 = vmatprep.subr.mxu0 0.0
    %901 = vmatpush1.msra.mxu0 0.0
    %902 = vmatprep.subr.mxu0 0.0
    %903 = vmatpush1.msra.mxu0 0.0
    %904 = vmatprep.subr.mxu0 0.0
    %905 = vmatpush1.msra.mxu0 0.0
    %906 = vmatprep.subr.mxu0 0.0
    %907 = vmatpush1.msra.mxu0 0.0
    %908 = vmatprep.subr.mxu0 0.0
    %909 = vmatpush1.msra.mxu0 0.0
    %910 = vmatprep.subr.mxu0 0.0
    %911 = vmatpush1.msra.mxu0 0.0
    %912 = vmatprep.subr.mxu0 0.0
    %913 = vmatpush1.msra.mxu0 0.0
    %914 = vmatprep.subr.mxu0 0.0
    %915 = vmatpush1.msra.mxu0 0.0
    %916 = vmatprep.subr.mxu0 0.0
    %917 = vmatpush1.msra.mxu0 0.0
    %918 = vmatprep.subr.mxu0 0.0
    %919 = vmatpush1.msra.mxu0 0.0
    %920 = vmatprep.subr.mxu0 0.0
    %921 = vmatpush1.msra.mxu0 0.0
    %922 = vmatprep.subr.mxu0 0.0
    %923 = vmatpush1.msra.mxu0 0.0
    %924 = vmatprep.subr.mxu0 0.0
    %925 = vmatpush1.msra.mxu0 0.0
    %926 = vmatprep.mubr.f32.mxu0 0.0
    %927 = vmatmul.mubr.f32.gmra.mrb[0].mxu0 %v857
    %v928 = vpop.f32.mrb[0].mxu0
    %v929 = vadd.f32 0.0, %v928
    %v930 = vpop.f32.mrb[0].mxu0
    %931 = vmatprep.mubr.f32.mxu0 0.0
    %932 = vmatmul.mubr.f32.gmra.mrb[0].mxu0 %v860
    %v933 = vpop.f32.mrb[0].mxu0
    %v934 = vadd.f32 0.0, %v933
    %v935 = vpop.f32.mrb[0].mxu0
    %936 = vdwg.mxu0
    %937 = vxpose.xlu0.b32.start [1/16] %v446, 128
    %938 = vxpose.xlu0.b32.cont [2/16] 0.0, 128
    %939 = vxpose.xlu0.b32.cont [3/16] 0.0, 128
    %940 = vxpose.xlu0.b32.cont [4/16] 0.0, 128
    %941 = vxpose.xlu0.b32.cont [5/16] 0.0, 128
    %942 = vxpose.xlu0.b32.cont [6/16] 0.0, 128
    %943 = vxpose.xlu0.b32.cont [7/16] 0.0, 128
    %944 = vxpose.xlu0.b32.cont [8/16] 0.0, 128
    %945 = vxpose.xlu0.b32.cont [9/16] 0.0, 128
    %946 = vxpose.xlu0.b32.cont [10/16] 0.0, 128
    %947 = vxpose.xlu0.b32.cont [11/16] 0.0, 128
    %948 = vxpose.xlu0.b32.cont [12/16] 0.0, 128
    %949 = vxpose.xlu0.b32.cont [13/16] 0.0, 128
    %950 = vxpose.xlu0.b32.cont [14/16] 0.0, 128
    %951 = vxpose.xlu0.b32.cont [15/16] 0.0, 128
    %952 = vxpose.xlu0.b32.end [16/16] 0.0, 128
    %v953 = vpop.trf.xlu0
    %v954 = vpop.trf.xlu0
    %v955 = vpop.trf.xlu0
    %v956 = vpop.trf.xlu0
    %v957 = vpop.trf.xlu0
    %v958 = vpop.trf.xlu0
    %v959 = vpop.trf.xlu0
    %v960 = vpop.trf.xlu0
    %v961 = vpop.trf.xlu0
    %v962 = vpop.trf.xlu0
    %v963 = vpop.trf.xlu0
    %v964 = vpop.trf.xlu0
    %v965 = vpop.trf.xlu0
    %v966 = vpop.trf.xlu0
    %v967 = vpop.trf.xlu0
    %v968 = vpop.trf.xlu0
    %v970 = vsel %vm516, %v953, 0
    %v973 = vsel %vm516, %v954, 0
    %975 = vmatprep.subr.mxu0 0.0
    %976 = vmatpush1.msra.mxu0 %v211
    %977 = vmatprep.subr.mxu0 0.0
    %978 = vmatpush1.msra.mxu0 0.0
    %979 = vmatprep.subr.mxu0 0.0
    %980 = vmatpush1.msra.mxu0 0.0
    %981 = vmatprep.subr.mxu0 0.0
    %982 = vmatpush1.msra.mxu0 0.0
    %983 = vmatprep.subr.mxu0 0.0
    %984 = vmatpush1.msra.mxu0 0.0
    %985 = vmatprep.subr.mxu0 0.0
    %986 = vmatpush1.msra.mxu0 0.0
    %987 = vmatprep.subr.mxu0 0.0
    %988 = vmatpush1.msra.mxu0 0.0
    %989 = vmatprep.subr.mxu0 0.0
    %990 = vmatpush1.msra.mxu0 0.0
    %991 = vmatprep.subr.mxu0 0.0
    %992 = vmatpush1.msra.mxu0 0.0
    %993 = vmatprep.subr.mxu0 0.0
    %994 = vmatpush1.msra.mxu0 0.0
    %995 = vmatprep.subr.mxu0 0.0
    %996 = vmatpush1.msra.mxu0 0.0
    %997 = vmatprep.subr.mxu0 0.0
    %998 = vmatpush1.msra.mxu0 0.0
    %999 = vmatprep.subr.mxu0 0.0
    %1000 = vmatpush1.msra.mxu0 0.0
    %1001 = vmatprep.subr.mxu0 0.0
    %1002 = vmatpush1.msra.mxu0 0.0
    %1003 = vmatprep.subr.mxu0 0.0
    %1004 = vmatpush1.msra.mxu0 0.0
    %1005 = vmatprep.subr.mxu0 0.0
    %1006 = vmatpush1.msra.mxu0 0.0
    %1007 = vmatprep.subr.mxu0 0.0
    %1008 = vmatpush1.msra.mxu0 0.0
    %1009 = vmatprep.subr.mxu0 0.0
    %1010 = vmatpush1.msra.mxu0 0.0
    %1011 = vmatprep.subr.mxu0 0.0
    %1012 = vmatpush1.msra.mxu0 0.0
    %1013 = vmatprep.subr.mxu0 0.0
    %1014 = vmatpush1.msra.mxu0 0.0
    %1015 = vmatprep.subr.mxu0 0.0
    %1016 = vmatpush1.msra.mxu0 0.0
    %1017 = vmatprep.subr.mxu0 0.0
    %1018 = vmatpush1.msra.mxu0 0.0
    %1019 = vmatprep.subr.mxu0 0.0
    %1020 = vmatpush1.msra.mxu0 0.0
    %1021 = vmatprep.subr.mxu0 0.0
    %1022 = vmatpush1.msra.mxu0 0.0
    %1023 = vmatprep.subr.mxu0 0.0
    %1024 = vmatpush1.msra.mxu0 0.0
    %1025 = vmatprep.subr.mxu0 0.0
    %1026 = vmatpush1.msra.mxu0 0.0
    %1027 = vmatprep.subr.mxu0 0.0
    %1028 = vmatpush1.msra.mxu0 0.0
    %1029 = vmatprep.subr.mxu0 0.0
    %1030 = vmatpush1.msra.mxu0 0.0
    %1031 = vmatprep.subr.mxu0 0.0
    %1032 = vmatpush1.msra.mxu0 0.0
    %1033 = vmatprep.subr.mxu0 0.0
    %1034 = vmatpush1.msra.mxu0 0.0
    %1035 = vmatprep.subr.mxu0 0.0
    %1036 = vmatpush1.msra.mxu0 0.0
    %1037 = vmatprep.subr.mxu0 0.0
    %1038 = vmatpush1.msra.mxu0 0.0
    %1039 = vmatprep.mubr.f32.mxu0 0.0
    %1040 = vmatmul.mubr.f32.gmra.mrb[0].mxu0 %v970
    %v1041 = vpop.f32.mrb[0].mxu0
    %v1042 = vadd.f32 0.0, %v1041
    %v1043 = vpop.f32.mrb[0].mxu0
    %1044 = vmatprep.mubr.f32.mxu0 0.0
    %1045 = vmatmul.mubr.f32.gmra.mrb[0].mxu0 %v973
    %v1046 = vpop.f32.mrb[0].mxu0
    %v1047 = vadd.f32 0.0, %v1046
    %v1048 = vpop.f32.mrb[0].mxu0
    %1049 = vdwg.mxu0
    %1050 = vxpose.xlu0.b32.start [1/16] %v451, 128
    %1051 = vxpose.xlu0.b32.cont [2/16] 0.0, 128
    %1052 = vxpose.xlu0.b32.cont [3/16] 0.0, 128
    %1053 = vxpose.xlu0.b32.cont [4/16] 0.0, 128
    %1054 = vxpose.xlu0.b32.cont [5/16] 0.0, 128
    %1055 = vxpose.xlu0.b32.cont [6/16] 0.0, 128
    %1056 = vxpose.xlu0.b32.cont [7/16] 0.0, 128
    %1057 = vxpose.xlu0.b32.cont [8/16] 0.0, 128
    %1058 = vxpose.xlu0.b32.cont [9/16] 0.0, 128
    %1059 = vxpose.xlu0.b32.cont [10/16] 0.0, 128
    %1060 = vxpose.xlu0.b32.cont [11/16] 0.0, 128
    %1061 = vxpose.xlu0.b32.cont [12/16] 0.0, 128
    %1062 = vxpose.xlu0.b32.cont [13/16] 0.0, 128
    %1063 = vxpose.xlu0.b32.cont [14/16] 0.0, 128
    %1064 = vxpose.xlu0.b32.cont [15/16] 0.0, 128
    %1065 = vxpose.xlu0.b32.end [16/16] 0.0, 128
    %v1066 = vpop.trf.xlu0
    %v1067 = vpop.trf.xlu0
    %v1068 = vpop.trf.xlu0
    %v1069 = vpop.trf.xlu0
    %v1070 = vpop.trf.xlu0
    %v1071 = vpop.trf.xlu0
    %v1072 = vpop.trf.xlu0
    %v1073 = vpop.trf.xlu0
    %v1074 = vpop.trf.xlu0
    %v1075 = vpop.trf.xlu0
    %v1076 = vpop.trf.xlu0
    %v1077 = vpop.trf.xlu0
    %v1078 = vpop.trf.xlu0
    %v1079 = vpop.trf.xlu0
    %v1080 = vpop.trf.xlu0
    %v1081 = vpop.trf.xlu0
    %v1083 = vsel %vm516, %v1066, 0
    %v1086 = vsel %vm516, %v1067, 0
    %1088 = vmatprep.subr.mxu0 0.0
    %1089 = vmatpush1.msra.mxu0 %v216
    %1090 = vmatprep.subr.mxu0 0.0
    %1091 = vmatpush1.msra.mxu0 0.0
    %1092 = vmatprep.subr.mxu0 0.0
    %1093 = vmatpush1.msra.mxu0 0.0
    %1094 = vmatprep.subr.mxu0 0.0
    %1095 = vmatpush1.msra.mxu0 0.0
    %1096 = vmatprep.subr.mxu0 0.0
    %1097 = vmatpush1.msra.mxu0 0.0
    %1098 = vmatprep.subr.mxu0 0.0
    %1099 = vmatpush1.msra.mxu0 0.0
    %1100 = vmatprep.subr.mxu0 0.0
    %1101 = vmatpush1.msra.mxu0 0.0
    %1102 = vmatprep.subr.mxu0 0.0
    %1103 = vmatpush1.msra.mxu0 0.0
    %1104 = vmatprep.subr.mxu0 0.0
    %1105 = vmatpush1.msra.mxu0 0.0
    %1106 = vmatprep.subr.mxu0 0.0
    %1107 = vmatpush1.msra.mxu0 0.0
    %1108 = vmatprep.subr.mxu0 0.0
    %1109 = vmatpush1.msra.mxu0 0.0
    %1110 = vmatprep.subr.mxu0 0.0
    %1111 = vmatpush1.msra.mxu0 0.0
    %1112 = vmatprep.subr.mxu0 0.0
    %1113 = vmatpush1.msra.mxu0 0.0
    %1114 = vmatprep.subr.mxu0 0.0
    %1115 = vmatpush1.msra.mxu0 0.0
    %1116 = vmatprep.subr.mxu0 0.0
    %1117 = vmatpush1.msra.mxu0 0.0
    %1118 = vmatprep.subr.mxu0 0.0
    %1119 = vmatpush1.msra.mxu0 0.0
    %1120 = vmatprep.subr.mxu0 0.0
    %1121 = vmatpush1.msra.mxu0 0.0
    %1122 = vmatprep.subr.mxu0 0.0
    %1123 = vmatpush1.msra.mxu0 0.0
    %1124 = vmatprep.subr.mxu0 0.0
    %1125 = vmatpush1.msra.mxu0 0.0
    %1126 = vmatprep.subr.mxu0 0.0
    %1127 = vmatpush1.msra.mxu0 0.0
    %1128 = vmatprep.subr.mxu0 0.0
    %1129 = vmatpush1.msra.mxu0 0.0
    %1130 = vmatprep.subr.mxu0 0.0
    %1131 = vmatpush1.msra.mxu0 0.0
    %1132 = vmatprep.subr.mxu0 0.0
    %1133 = vmatpush1.msra.mxu0 0.0
    %1134 = vmatprep.subr.mxu0 0.0
    %1135 = vmatpush1.msra.mxu0 0.0
    %1136 = vmatprep.subr.mxu0 0.0
    %1137 = vmatpush1.msra.mxu0 0.0
    %1138 = vmatprep.subr.mxu0 0.0
    %1139 = vmatpush1.msra.mxu0 0.0
    %1140 = vmatprep.subr.mxu0 0.0
    %1141 = vmatpush1.msra.mxu0 0.0
    %1142 = vmatprep.subr.mxu0 0.0
    %1143 = vmatpush1.msra.mxu0 0.0
    %1144 = vmatprep.subr.mxu0 0.0
    %1145 = vmatpush1.msra.mxu0 0.0
    %1146 = vmatprep.subr.mxu0 0.0
    %1147 = vmatpush1.msra.mxu0 0.0
    %1148 = vmatprep.subr.mxu0 0.0
    %1149 = vmatpush1.msra.mxu0 0.0
    %1150 = vmatprep.subr.mxu0 0.0
    %1151 = vmatpush1.msra.mxu0 0.0
    %1152 = vmatprep.mubr.f32.mxu0 0.0
    %1153 = vmatmul.mubr.f32.gmra.mrb[0].mxu0 %v1083
    %v1154 = vpop.f32.mrb[0].mxu0
    %v1155 = vadd.f32 0.0, %v1154
    %v1156 = vpop.f32.mrb[0].mxu0
    %1157 = vmatprep.mubr.f32.mxu0 0.0
    %1158 = vmatmul.mubr.f32.gmra.mrb[0].mxu0 %v1086
    %v1159 = vpop.f32.mrb[0].mxu0
    %v1160 = vadd.f32 0.0, %v1159
    %v1161 = vpop.f32.mrb[0].mxu0
    %1162 = vdwg.mxu0
    %1163 = vxpose.xlu0.b32.start [1/16] %v456, 128
    %1164 = vxpose.xlu0.b32.cont [2/16] 0.0, 128
    %1165 = vxpose.xlu0.b32.cont [3/16] 0.0, 128
    %1166 = vxpose.xlu0.b32.cont [4/16] 0.0, 128
    %1167 = vxpose.xlu0.b32.cont [5/16] 0.0, 128
    %1168 = vxpose.xlu0.b32.cont [6/16] 0.0, 128
    %1169 = vxpose.xlu0.b32.cont [7/16] 0.0, 128
    %1170 = vxpose.xlu0.b32.cont [8/16] 0.0, 128
    %1171 = vxpose.xlu0.b32.cont [9/16] 0.0, 128
    %1172 = vxpose.xlu0.b32.cont [10/16] 0.0, 128
    %1173 = vxpose.xlu0.b32.cont [11/16] 0.0, 128
    %1174 = vxpose.xlu0.b32.cont [12/16] 0.0, 128
    %1175 = vxpose.xlu0.b32.cont [13/16] 0.0, 128
    %1176 = vxpose.xlu0.b32.cont [14/16] 0.0, 128
    %1177 = vxpose.xlu0.b32.cont [15/16] 0.0, 128
    %1178 = vxpose.xlu0.b32.end [16/16] 0.0, 128
    %v1179 = vpop.trf.xlu0
    %v1180 = vpop.trf.xlu0
    %v1181 = vpop.trf.xlu0
    %v1182 = vpop.trf.xlu0
    %v1183 = vpop.trf.xlu0
    %v1184 = vpop.trf.xlu0
    %v1185 = vpop.trf.xlu0
    %v1186 = vpop.trf.xlu0
    %v1187 = vpop.trf.xlu0
    %v1188 = vpop.trf.xlu0
    %v1189 = vpop.trf.xlu0
    %v1190 = vpop.trf.xlu0
    %v1191 = vpop.trf.xlu0
    %v1192 = vpop.trf.xlu0
    %v1193 = vpop.trf.xlu0
    %v1194 = vpop.trf.xlu0
    %v1196 = vsel %vm516, %v1179, 0
    %v1199 = vsel %vm516, %v1180, 0
    %1201 = vmatprep.subr.mxu0 0.0
    %1202 = vmatpush1.msra.mxu0 %v221
    %1203 = vmatprep.subr.mxu0 0.0
    %1204 = vmatpush1.msra.mxu0 0.0
    %1205 = vmatprep.subr.mxu0 0.0
    %1206 = vmatpush1.msra.mxu0 0.0
    %1207 = vmatprep.subr.mxu0 0.0
    %1208 = vmatpush1.msra.mxu0 0.0
    %1209 = vmatprep.subr.mxu0 0.0
    %1210 = vmatpush1.msra.mxu0 0.0
    %1211 = vmatprep.subr.mxu0 0.0
    %1212 = vmatpush1.msra.mxu0 0.0
    %1213 = vmatprep.subr.mxu0 0.0
    %1214 = vmatpush1.msra.mxu0 0.0
    %1215 = vmatprep.subr.mxu0 0.0
    %1216 = vmatpush1.msra.mxu0 0.0
    %1217 = vmatprep.subr.mxu0 0.0
    %1218 = vmatpush1.msra.mxu0 0.0
    %1219 = vmatprep.subr.mxu0 0.0
    %1220 = vmatpush1.msra.mxu0 0.0
    %1221 = vmatprep.subr.mxu0 0.0
    %1222 = vmatpush1.msra.mxu0 0.0
    %1223 = vmatprep.subr.mxu0 0.0
    %1224 = vmatpush1.msra.mxu0 0.0
    %1225 = vmatprep.subr.mxu0 0.0
    %1226 = vmatpush1.msra.mxu0 0.0
    %1227 = vmatprep.subr.mxu0 0.0
    %1228 = vmatpush1.msra.mxu0 0.0
    %1229 = vmatprep.subr.mxu0 0.0
    %1230 = vmatpush1.msra.mxu0 0.0
    %1231 = vmatprep.subr.mxu0 0.0
    %1232 = vmatpush1.msra.mxu0 0.0
    %1233 = vmatprep.subr.mxu0 0.0
    %1234 = vmatpush1.msra.mxu0 0.0
    %1235 = vmatprep.subr.mxu0 0.0
    %1236 = vmatpush1.msra.mxu0 0.0
    %1237 = vmatprep.subr.mxu0 0.0
    %1238 = vmatpush1.msra.mxu0 0.0
    %1239 = vmatprep.subr.mxu0 0.0
    %1240 = vmatpush1.msra.mxu0 0.0
    %1241 = vmatprep.subr.mxu0 0.0
    %1242 = vmatpush1.msra.mxu0 0.0
    %1243 = vmatprep.subr.mxu0 0.0
    %1244 = vmatpush1.msra.mxu0 0.0
    %1245 = vmatprep.subr.mxu0 0.0
    %1246 = vmatpush1.msra.mxu0 0.0
    %1247 = vmatprep.subr.mxu0 0.0
    %1248 = vmatpush1.msra.mxu0 0.0
    %1249 = vmatprep.subr.mxu0 0.0
    %1250 = vmatpush1.msra.mxu0 0.0
    %1251 = vmatprep.subr.mxu0 0.0
    %1252 = vmatpush1.msra.mxu0 0.0
    %1253 = vmatprep.subr.mxu0 0.0
    %1254 = vmatpush1.msra.mxu0 0.0
    %1255 = vmatprep.subr.mxu0 0.0
    %1256 = vmatpush1.msra.mxu0 0.0
    %1257 = vmatprep.subr.mxu0 0.0
    %1258 = vmatpush1.msra.mxu0 0.0
    %1259 = vmatprep.subr.mxu0 0.0
    %1260 = vmatpush1.msra.mxu0 0.0
    %1261 = vmatprep.subr.mxu0 0.0
    %1262 = vmatpush1.msra.mxu0 0.0
    %1263 = vmatprep.subr.mxu0 0.0
    %1264 = vmatpush1.msra.mxu0 0.0
    %1265 = vmatprep.mubr.f32.mxu0 0.0
    %1266 = vmatmul.mubr.f32.gmra.mrb[0].mxu0 %v1196
    %v1267 = vpop.f32.mrb[0].mxu0
    %v1268 = vadd.f32 0.0, %v1267
    %v1269 = vpop.f32.mrb[0].mxu0
    %1270 = vmatprep.mubr.f32.mxu0 0.0
    %1271 = vmatmul.mubr.f32.gmra.mrb[0].mxu0 %v1199
    %v1272 = vpop.f32.mrb[0].mxu0
    %v1273 = vadd.f32 0.0, %v1272
    %v1274 = vpop.f32.mrb[0].mxu0
    %1275 = vdwg.mxu0
    %1276 = vxpose.xlu0.b32.start [1/16] %v461, 128
    %1277 = vxpose.xlu0.b32.cont [2/16] 0.0, 128
    %1278 = vxpose.xlu0.b32.cont [3/16] 0.0, 128
    %1279 = vxpose.xlu0.b32.cont [4/16] 0.0, 128
    %1280 = vxpose.xlu0.b32.cont [5/16] 0.0, 128
    %1281 = vxpose.xlu0.b32.cont [6/16] 0.0, 128
    %1282 = vxpose.xlu0.b32.cont [7/16] 0.0, 128
    %1283 = vxpose.xlu0.b32.cont [8/16] 0.0, 128
    %1284 = vxpose.xlu0.b32.cont [9/16] 0.0, 128
    %1285 = vxpose.xlu0.b32.cont [10/16] 0.0, 128
    %1286 = vxpose.xlu0.b32.cont [11/16] 0.0, 128
    %1287 = vxpose.xlu0.b32.cont [12/16] 0.0, 128
    %1288 = vxpose.xlu0.b32.cont [13/16] 0.0, 128
    %1289 = vxpose.xlu0.b32.cont [14/16] 0.0, 128
    %1290 = vxpose.xlu0.b32.cont [15/16] 0.0, 128
    %1291 = vxpose.xlu0.b32.end [16/16] 0.0, 128
    %v1292 = vpop.trf.xlu0
    %v1293 = vpop.trf.xlu0
    %v1294 = vpop.trf.xlu0
    %v1295 = vpop.trf.xlu0
    %v1296 = vpop.trf.xlu0
    %v1297 = vpop.trf.xlu0
    %v1298 = vpop.trf.xlu0
    %v1299 = vpop.trf.xlu0
    %v1300 = vpop.trf.xlu0
    %v1301 = vpop.trf.xlu0
    %v1302 = vpop.trf.xlu0
    %v1303 = vpop.trf.xlu0
    %v1304 = vpop.trf.xlu0
    %v1305 = vpop.trf.xlu0
    %v1306 = vpop.trf.xlu0
    %v1307 = vpop.trf.xlu0
    %v1309 = vsel %vm516, %v1292, 0
    %v1312 = vsel %vm516, %v1293, 0
    %1314 = vmatprep.subr.mxu0 0.0
    %1315 = vmatpush1.msra.mxu0 %v226
    %1316 = vmatprep.subr.mxu0 0.0
    %1317 = vmatpush1.msra.mxu0 0.0
    %1318 = vmatprep.subr.mxu0 0.0
    %1319 = vmatpush1.msra.mxu0 0.0
    %1320 = vmatprep.subr.mxu0 0.0
    %1321 = vmatpush1.msra.mxu0 0.0
    %1322 = vmatprep.subr.mxu0 0.0
    %1323 = vmatpush1.msra.mxu0 0.0
    %1324 = vmatprep.subr.mxu0 0.0
    %1325 = vmatpush1.msra.mxu0 0.0
    %1326 = vmatprep.subr.mxu0 0.0
    %1327 = vmatpush1.msra.mxu0 0.0
    %1328 = vmatprep.subr.mxu0 0.0
    %1329 = vmatpush1.msra.mxu0 0.0
    %1330 = vmatprep.subr.mxu0 0.0
    %1331 = vmatpush1.msra.mxu0 0.0
    %1332 = vmatprep.subr.mxu0 0.0
    %1333 = vmatpush1.msra.mxu0 0.0
    %1334 = vmatprep.subr.mxu0 0.0
    %1335 = vmatpush1.msra.mxu0 0.0
    %1336 = vmatprep.subr.mxu0 0.0
    %1337 = vmatpush1.msra.mxu0 0.0
    %1338 = vmatprep.subr.mxu0 0.0
    %1339 = vmatpush1.msra.mxu0 0.0
    %1340 = vmatprep.subr.mxu0 0.0
    %1341 = vmatpush1.msra.mxu0 0.0
    %1342 = vmatprep.subr.mxu0 0.0
    %1343 = vmatpush1.msra.mxu0 0.0
    %1344 = vmatprep.subr.mxu0 0.0
    %1345 = vmatpush1.msra.mxu0 0.0
    %1346 = vmatprep.subr.mxu0 0.0
    %1347 = vmatpush1.msra.mxu0 0.0
    %1348 = vmatprep.subr.mxu0 0.0
    %1349 = vmatpush1.msra.mxu0 0.0
    %1350 = vmatprep.subr.mxu0 0.0
    %1351 = vmatpush1.msra.mxu0 0.0
    %1352 = vmatprep.subr.mxu0 0.0
    %1353 = vmatpush1.msra.mxu0 0.0
    %1354 = vmatprep.subr.mxu0 0.0
    %1355 = vmatpush1.msra.mxu0 0.0
    %1356 = vmatprep.subr.mxu0 0.0
    %1357 = vmatpush1.msra.mxu0 0.0
    %1358 = vmatprep.subr.mxu0 0.0
    %1359 = vmatpush1.msra.mxu0 0.0
    %1360 = vmatprep.subr.mxu0 0.0
    %1361 = vmatpush1.msra.mxu0 0.0
    %1362 = vmatprep.subr.mxu0 0.0
    %1363 = vmatpush1.msra.mxu0 0.0
    %1364 = vmatprep.subr.mxu0 0.0
    %1365 = vmatpush1.msra.mxu0 0.0
    %1366 = vmatprep.subr.mxu0 0.0
    %1367 = vmatpush1.msra.mxu0 0.0
    %1368 = vmatprep.subr.mxu0 0.0
    %1369 = vmatpush1.msra.mxu0 0.0
    %1370 = vmatprep.subr.mxu0 0.0
    %1371 = vmatpush1.msra.mxu0 0.0
    %1372 = vmatprep.subr.mxu0 0.0
    %1373 = vmatpush1.msra.mxu0 0.0
    %1374 = vmatprep.subr.mxu0 0.0
    %1375 = vmatpush1.msra.mxu0 0.0
    %1376 = vmatprep.subr.mxu0 0.0
    %1377 = vmatpush1.msra.mxu0 0.0
    %1378 = vmatprep.mubr.f32.mxu0 0.0
    %1379 = vmatmul.mubr.f32.gmra.mrb[0].mxu0 %v1309
    %v1380 = vpop.f32.mrb[0].mxu0
    %v1381 = vadd.f32 0.0, %v1380
    %v1382 = vpop.f32.mrb[0].mxu0
    %1383 = vmatprep.mubr.f32.mxu0 0.0
    %1384 = vmatmul.mubr.f32.gmra.mrb[0].mxu0 %v1312
    %v1385 = vpop.f32.mrb[0].mxu0
    %v1386 = vadd.f32 0.0, %v1385
    %v1387 = vpop.f32.mrb[0].mxu0
    %1388 = vdwg.mxu0
    %vm1389 = vcmask 523264
    %v1390 = vsel %vm1389, %v590, -inf
    %v1391 = vsel %vm1389, %v595, -inf
    %v1392 = vmax.f32 %v1390, %v1391
    %v1393 = vrot.slane %v1392, 4
    %v1394 = vmax.f32 %v1392, %v1393
    %v1395 = vrot.slane %v1394, 2
    %v1396 = vmax.f32 %v1394, %v1395
    %v1397 = vrot.slane %v1396, 1
    %v1398 = vmax.f32 %v1396, %v1397
    %v1399 = vsel %vm1389, %v703, -inf
    %v1400 = vsel %vm1389, %v708, -inf
    %v1401 = vmax.f32 %v1399, %v1400
    %v1402 = vrot.slane %v1401, 4
    %v1403 = vmax.f32 %v1401, %v1402
    %v1404 = vrot.slane %v1403, 2
    %v1405 = vmax.f32 %v1403, %v1404
    %v1406 = vrot.slane %v1405, 1
    %v1407 = vmax.f32 %v1405, %v1406
    %v1408 = vsel %vm1389, %v816, -inf
    %v1409 = vsel %vm1389, %v821, -inf
    %v1410 = vmax.f32 %v1408, %v1409
    %v1411 = vrot.slane %v1410, 4
    %v1412 = vmax.f32 %v1410, %v1411
    %v1413 = vrot.slane %v1412, 2
    %v1414 = vmax.f32 %v1412, %v1413
    %v1415 = vrot.slane %v1414, 1
    %v1416 = vmax.f32 %v1414, %v1415
    %v1417 = vsel %vm1389, %v929, -inf
    %v1418 = vsel %vm1389, %v934, -inf
    %v1419 = vmax.f32 %v1417, %v1418
    %v1420 = vrot.slane %v1419, 4
    %v1421 = vmax.f32 %v1419, %v1420
    %v1422 = vrot.slane %v1421, 2
    %v1423 = vmax.f32 %v1421, %v1422
    %v1424 = vrot.slane %v1423, 1
    %v1425 = vmax.f32 %v1423, %v1424
    %v1426 = vsel %vm1389, %v1042, -inf
    %v1427 = vsel %vm1389, %v1047, -inf
    %v1428 = vmax.f32 %v1426, %v1427
    %v1429 = vrot.slane %v1428, 4
    %v1430 = vmax.f32 %v1428, %v1429
    %v1431 = vrot.slane %v1430, 2
    %v1432 = vmax.f32 %v1430, %v1431
    %v1433 = vrot.slane %v1432, 1
    %v1434 = vmax.f32 %v1432, %v1433
    %v1435 = vsel %vm1389, %v1155, -inf
    %v1436 = vsel %vm1389, %v1160, -inf
    %v1437 = vmax.f32 %v1435, %v1436
    %v1438 = vrot.slane %v1437, 4
    %v1439 = vmax.f32 %v1437, %v1438
    %v1440 = vrot.slane %v1439, 2
    %v1441 = vmax.f32 %v1439, %v1440
    %v1442 = vrot.slane %v1441, 1
    %v1443 = vmax.f32 %v1441, %v1442
    %v1444 = vsel %vm1389, %v1268, -inf
    %v1445 = vsel %vm1389, %v1273, -inf
    %v1446 = vmax.f32 %v1444, %v1445
    %v1447 = vrot.slane %v1446, 4
    %v1448 = vmax.f32 %v1446, %v1447
    %v1449 = vrot.slane %v1448, 2
    %v1450 = vmax.f32 %v1448, %v1449
    %v1451 = vrot.slane %v1450, 1
    %v1452 = vmax.f32 %v1450, %v1451
    %v1453 = vsel %vm1389, %v1381, -inf
    %v1454 = vsel %vm1389, %v1386, -inf
    %v1455 = vmax.f32 %v1453, %v1454
    %v1456 = vrot.slane %v1455, 4
    %v1457 = vmax.f32 %v1455, %v1456
    %v1458 = vrot.slane %v1457, 2
    %v1459 = vmax.f32 %v1457, %v1458
    %v1460 = vrot.slane %v1459, 1
    %v1461 = vmax.f32 %v1459, %v1460
    %v1462 = vsub.f32 %v590, %v1398
    %v1463 = vsub.f32 %v595, %v1398
    %v1464 = vsub.f32 %v703, %v1407
    %v1465 = vsub.f32 %v708, %v1407
    %v1466 = vsub.f32 %v816, %v1416
    %v1467 = vsub.f32 %v821, %v1416
    %v1468 = vsub.f32 %v929, %v1425
    %v1469 = vsub.f32 %v934, %v1425
    %v1470 = vsub.f32 %v1042, %v1434
    %v1471 = vsub.f32 %v1047, %v1434
    %v1472 = vsub.f32 %v1155, %v1443
    %v1473 = vsub.f32 %v1160, %v1443
    %v1474 = vsub.f32 %v1268, %v1452
    %v1475 = vsub.f32 %v1273, %v1452
    %v1476 = vsub.f32 %v1381, %v1461
    %v1477 = vsub.f32 %v1386, %v1461
    %v1478 = vmul.f32 %v1462, 1.442695
    %v1479 = vpow.pop %v1478
    %v1480 = vmul.f32 %v1463, 1.442695
    %v1481 = vpow.pop %v1480
    %v1482 = vmul.f32 %v1464, 1.442695
    %v1483 = vpow.pop %v1482
    %v1484 = vmul.f32 %v1465, 1.442695
    %v1485 = vpow.pop %v1484
    %v1486 = vmul.f32 %v1466, 1.442695
    %v1487 = vpow.pop %v1486
    %v1488 = vmul.f32 %v1467, 1.442695
    %v1489 = vpow.pop %v1488
    %v1490 = vmul.f32 %v1468, 1.442695
    %v1491 = vpow.pop %v1490
    %v1492 = vmul.f32 %v1469, 1.442695
    %v1493 = vpow.pop %v1492
    %v1494 = vmul.f32 %v1470, 1.442695
    %v1495 = vpow.pop %v1494
    %v1496 = vmul.f32 %v1471, 1.442695
    %v1497 = vpow.pop %v1496
    %v1498 = vmul.f32 %v1472, 1.442695
    %v1499 = vpow.pop %v1498
    %v1500 = vmul.f32 %v1473, 1.442695
    %v1501 = vpow.pop %v1500
    %v1502 = vmul.f32 %v1474, 1.442695
    %v1503 = vpow.pop %v1502
    %v1504 = vmul.f32 %v1475, 1.442695
    %v1505 = vpow.pop %v1504
    %v1506 = vmul.f32 %v1476, 1.442695
    %v1507 = vpow.pop %v1506
    %v1508 = vmul.f32 %v1477, 1.442695
    %v1509 = vpow.pop %v1508
    %v1510 = vsel %vm1389, %v1479, 0.0
    %v1511 = vsel %vm1389, %v1481, 0.0
    %v1512 = vadd.f32 %v1510, %v1511
    %v1513 = vrot.slane %v1512, 4
    %v1514 = vadd.f32 %v1512, %v1513
    %v1515 = vrot.slane %v1514, 2
    %v1516 = vadd.f32 %v1514, %v1515
    %v1517 = vrot.slane %v1516, 1
    %v1518 = vadd.f32 %v1516, %v1517
    %v1519 = vsel %vm1389, %v1483, 0.0
    %v1520 = vsel %vm1389, %v1485, 0.0
    %v1521 = vadd.f32 %v1519, %v1520
    %v1522 = vrot.slane %v1521, 4
    %v1523 = vadd.f32 %v1521, %v1522
    %v1524 = vrot.slane %v1523, 2
    %v1525 = vadd.f32 %v1523, %v1524
    %v1526 = vrot.slane %v1525, 1
    %v1527 = vadd.f32 %v1525, %v1526
    %v1528 = vsel %vm1389, %v1487, 0.0
    %v1529 = vsel %vm1389, %v1489, 0.0
    %v1530 = vadd.f32 %v1528, %v1529
    %v1531 = vrot.slane %v1530, 4
    %v1532 = vadd.f32 %v1530, %v1531
    %v1533 = vrot.slane %v1532, 2
    %v1534 = vadd.f32 %v1532, %v1533
    %v1535 = vrot.slane %v1534, 1
    %v1536 = vadd.f32 %v1534, %v1535
    %v1537 = vsel %vm1389, %v1491, 0.0
    %v1538 = vsel %vm1389, %v1493, 0.0
    %v1539 = vadd.f32 %v1537, %v1538
    %v1540 = vrot.slane %v1539, 4
    %v1541 = vadd.f32 %v1539, %v1540
    %v1542 = vrot.slane %v1541, 2
    %v1543 = vadd.f32 %v1541, %v1542
    %v1544 = vrot.slane %v1543, 1
    %v1545 = vadd.f32 %v1543, %v1544
    %v1546 = vsel %vm1389, %v1495, 0.0
    %v1547 = vsel %vm1389, %v1497, 0.0
    %v1548 = vadd.f32 %v1546, %v1547
    %v1549 = vrot.slane %v1548, 4
    %v1550 = vadd.f32 %v1548, %v1549
    %v1551 = vrot.slane %v1550, 2
    %v1552 = vadd.f32 %v1550, %v1551
    %v1553 = vrot.slane %v1552, 1
    %v1554 = vadd.f32 %v1552, %v1553
    %v1555 = vsel %vm1389, %v1499, 0.0
    %v1556 = vsel %vm1389, %v1501, 0.0
    %v1557 = vadd.f32 %v1555, %v1556
    %v1558 = vrot.slane %v1557, 4
    %v1559 = vadd.f32 %v1557, %v1558
    %v1560 = vrot.slane %v1559, 2
    %v1561 = vadd.f32 %v1559, %v1560
    %v1562 = vrot.slane %v1561, 1
    %v1563 = vadd.f32 %v1561, %v1562
    %v1564 = vsel %vm1389, %v1503, 0.0
    %v1565 = vsel %vm1389, %v1505, 0.0
    %v1566 = vadd.f32 %v1564, %v1565
    %v1567 = vrot.slane %v1566, 4
    %v1568 = vadd.f32 %v1566, %v1567
    %v1569 = vrot.slane %v1568, 2
    %v1570 = vadd.f32 %v1568, %v1569
    %v1571 = vrot.slane %v1570, 1
    %v1572 = vadd.f32 %v1570, %v1571
    %v1573 = vsel %vm1389, %v1507, 0.0
    %v1574 = vsel %vm1389, %v1509, 0.0
    %v1575 = vadd.f32 %v1573, %v1574
    %v1576 = vrot.slane %v1575, 4
    %v1577 = vadd.f32 %v1575, %v1576
    %v1578 = vrot.slane %v1577, 2
    %v1579 = vadd.f32 %v1577, %v1578
    %v1580 = vrot.slane %v1579, 1
    %v1581 = vadd.f32 %v1579, %v1580
    %v1582 = vrcp.pop %v1518
    %v1583 = vrcp.pop %v1527
    %v1584 = vrcp.pop %v1536
    %v1585 = vrcp.pop %v1545
    %v1586 = vrcp.pop %v1554
    %v1587 = vrcp.pop %v1563
    %v1588 = vrcp.pop %v1572
    %v1589 = vrcp.pop %v1581
    %v1590 = vmul.f32 %v1479, %v1582
    %v1591 = vmul.f32 %v1481, %v1582
    %v1592 = vmul.f32 %v1483, %v1583
    %v1593 = vmul.f32 %v1485, %v1583
    %v1594 = vmul.f32 %v1487, %v1584
    %v1595 = vmul.f32 %v1489, %v1584
    %v1596 = vmul.f32 %v1491, %v1585
    %v1597 = vmul.f32 %v1493, %v1585
    %v1598 = vmul.f32 %v1495, %v1586
    %v1599 = vmul.f32 %v1497, %v1586
    %v1600 = vmul.f32 %v1499, %v1587
    %v1601 = vmul.f32 %v1501, %v1587
    %v1602 = vmul.f32 %v1503, %v1588
    %v1603 = vmul.f32 %v1505, %v1588
    %v1604 = vmul.f32 %v1507, %v1589
    %v1605 = vmul.f32 %v1509, %v1589
    %v1607 = vsel %vm249, %v361, 0
    %1609 = vmatprep.subr.mxu0 0.0
    %1610 = vmatpush1.msra.mxu0 %v1590
    %1611 = vmatprep.subr.mxu0 0.0
    %1612 = vmatpush1.msra.mxu0 %v1591
    %1613 = vmatprep.subr.mxu0 0.0
    %1614 = vmatpush1.msra.mxu0 0.0
    %1615 = vmatprep.subr.mxu0 0.0
    %1616 = vmatpush1.msra.mxu0 0.0
    %1617 = vmatprep.subr.mxu0 0.0
    %1618 = vmatpush1.msra.mxu0 0.0
    %1619 = vmatprep.subr.mxu0 0.0
    %1620 = vmatpush1.msra.mxu0 0.0
    %1621 = vmatprep.subr.mxu0 0.0
    %1622 = vmatpush1.msra.mxu0 0.0
    %1623 = vmatprep.subr.mxu0 0.0
    %1624 = vmatpush1.msra.mxu0 0.0
    %1625 = vmatprep.subr.mxu0 0.0
    %1626 = vmatpush1.msra.mxu0 0.0
    %1627 = vmatprep.subr.mxu0 0.0
    %1628 = vmatpush1.msra.mxu0 0.0
    %1629 = vmatprep.subr.mxu0 0.0
    %1630 = vmatpush1.msra.mxu0 0.0
    %1631 = vmatprep.subr.mxu0 0.0
    %1632 = vmatpush1.msra.mxu0 0.0
    %1633 = vmatprep.subr.mxu0 0.0
    %1634 = vmatpush1.msra.mxu0 0.0
    %1635 = vmatprep.subr.mxu0 0.0
    %1636 = vmatpush1.msra.mxu0 0.0
    %1637 = vmatprep.subr.mxu0 0.0
    %1638 = vmatpush1.msra.mxu0 0.0
    %1639 = vmatprep.subr.mxu0 0.0
    %1640 = vmatpush1.msra.mxu0 0.0
    %1641 = vmatprep.subr.mxu0 0.0
    %1642 = vmatpush1.msra.mxu0 0.0
    %1643 = vmatprep.subr.mxu0 0.0
    %1644 = vmatpush1.msra.mxu0 0.0
    %1645 = vmatprep.subr.mxu0 0.0
    %1646 = vmatpush1.msra.mxu0 0.0
    %1647 = vmatprep.subr.mxu0 0.0
    %1648 = vmatpush1.msra.mxu0 0.0
    %1649 = vmatprep.subr.mxu0 0.0
    %1650 = vmatpush1.msra.mxu0 0.0
    %1651 = vmatprep.subr.mxu0 0.0
    %1652 = vmatpush1.msra.mxu0 0.0
    %1653 = vmatprep.subr.mxu0 0.0
    %1654 = vmatpush1.msra.mxu0 0.0
    %1655 = vmatprep.subr.mxu0 0.0
    %1656 = vmatpush1.msra.mxu0 0.0
    %1657 = vmatprep.subr.mxu0 0.0
    %1658 = vmatpush1.msra.mxu0 0.0
    %1659 = vmatprep.subr.mxu0 0.0
    %1660 = vmatpush1.msra.mxu0 0.0
    %1661 = vmatprep.subr.mxu0 0.0
    %1662 = vmatpush1.msra.mxu0 0.0
    %1663 = vmatprep.subr.mxu0 0.0
    %1664 = vmatpush1.msra.mxu0 0.0
    %1665 = vmatprep.subr.mxu0 0.0
    %1666 = vmatpush1.msra.mxu0 0.0
    %1667 = vmatprep.subr.mxu0 0.0
    %1668 = vmatpush1.msra.mxu0 0.0
    %1669 = vmatprep.subr.mxu0 0.0
    %1670 = vmatpush1.msra.mxu0 0.0
    %1671 = vmatprep.subr.mxu0 0.0
    %1672 = vmatpush1.msra.mxu0 0.0
    %1673 = vmatprep.mubr.f32.mxu0 0.0
    %1674 = vmatmul.mubr.f32.gmra.mrb[0].mxu0 %v1607
    %v1675 = vpop.f32.mrb[0].mxu0
    %v1676 = vadd.f32 0.0, %v1675
    %v1677 = vpop.f32.mrb[0].mxu0
    %1678 = vdwg.mxu0
    %v1680 = vsel %vm249, %v366, 0
    %1682 = vmatprep.subr.mxu0 0.0
    %1683 = vmatpush1.msra.mxu0 %v1592
    %1684 = vmatprep.subr.mxu0 0.0
    %1685 = vmatpush1.msra.mxu0 %v1593
    %1686 = vmatprep.subr.mxu0 0.0
    %1687 = vmatpush1.msra.mxu0 0.0
    %1688 = vmatprep.subr.mxu0 0.0
    %1689 = vmatpush1.msra.mxu0 0.0
    %1690 = vmatprep.subr.mxu0 0.0
    %1691 = vmatpush1.msra.mxu0 0.0
    %1692 = vmatprep.subr.mxu0 0.0
    %1693 = vmatpush1.msra.mxu0 0.0
    %1694 = vmatprep.subr.mxu0 0.0
    %1695 = vmatpush1.msra.mxu0 0.0
    %1696 = vmatprep.subr.mxu0 0.0
    %1697 = vmatpush1.msra.mxu0 0.0
    %1698 = vmatprep.subr.mxu0 0.0
    %1699 = vmatpush1.msra.mxu0 0.0
    %1700 = vmatprep.subr.mxu0 0.0
    %1701 = vmatpush1.msra.mxu0 0.0
    %1702 = vmatprep.subr.mxu0 0.0
    %1703 = vmatpush1.msra.mxu0 0.0
    %1704 = vmatprep.subr.mxu0 0.0
    %1705 = vmatpush1.msra.mxu0 0.0
    %1706 = vmatprep.subr.mxu0 0.0
    %1707 = vmatpush1.msra.mxu0 0.0
    %1708 = vmatprep.subr.mxu0 0.0
    %1709 = vmatpush1.msra.mxu0 0.0
    %1710 = vmatprep.subr.mxu0 0.0
    %1711 = vmatpush1.msra.mxu0 0.0
    %1712 = vmatprep.subr.mxu0 0.0
    %1713 = vmatpush1.msra.mxu0 0.0
    %1714 = vmatprep.subr.mxu0 0.0
    %1715 = vmatpush1.msra.mxu0 0.0
    %1716 = vmatprep.subr.mxu0 0.0
    %1717 = vmatpush1.msra.mxu0 0.0
    %1718 = vmatprep.subr.mxu0 0.0
    %1719 = vmatpush1.msra.mxu0 0.0
    %1720 = vmatprep.subr.mxu0 0.0
    %1721 = vmatpush1.msra.mxu0 0.0
    %1722 = vmatprep.subr.mxu0 0.0
    %1723 = vmatpush1.msra.mxu0 0.0
    %1724 = vmatprep.subr.mxu0 0.0
    %1725 = vmatpush1.msra.mxu0 0.0
    %1726 = vmatprep.subr.mxu0 0.0
    %1727 = vmatpush1.msra.mxu0 0.0
    %1728 = vmatprep.subr.mxu0 0.0
    %1729 = vmatpush1.msra.mxu0 0.0
    %1730 = vmatprep.subr.mxu0 0.0
    %1731 = vmatpush1.msra.mxu0 0.0
    %1732 = vmatprep.subr.mxu0 0.0
    %1733 = vmatpush1.msra.mxu0 0.0
    %1734 = vmatprep.subr.mxu0 0.0
    %1735 = vmatpush1.msra.mxu0 0.0
    %1736 = vmatprep.subr.mxu0 0.0
    %1737 = vmatpush1.msra.mxu0 0.0
    %1738 = vmatprep.subr.mxu0 0.0
    %1739 = vmatpush1.msra.mxu0 0.0
    %1740 = vmatprep.subr.mxu0 0.0
    %1741 = vmatpush1.msra.mxu0 0.0
    %1742 = vmatprep.subr.mxu0 0.0
    %1743 = vmatpush1.msra.mxu0 0.0
    %1744 = vmatprep.subr.mxu0 0.0
    %1745 = vmatpush1.msra.mxu0 0.0
    %1746 = vmatprep.mubr.f32.mxu0 0.0
    %1747 = vmatmul.mubr.f32.gmra.mrb[0].mxu0 %v1680
    %v1748 = vpop.f32.mrb[0].mxu0
    %v1749 = vadd.f32 0.0, %v1748
    %v1750 = vpop.f32.mrb[0].mxu0
    %1751 = vdwg.mxu0
    %v1753 = vsel %vm249, %v371, 0
    %1755 = vmatprep.subr.mxu0 0.0
    %1756 = vmatpush1.msra.mxu0 %v1594
    %1757 = vmatprep.subr.mxu0 0.0
    %1758 = vmatpush1.msra.mxu0 %v1595
    %1759 = vmatprep.subr.mxu0 0.0
    %1760 = vmatpush1.msra.mxu0 0.0
    %1761 = vmatprep.subr.mxu0 0.0
    %1762 = vmatpush1.msra.mxu0 0.0
    %1763 = vmatprep.subr.mxu0 0.0
    %1764 = vmatpush1.msra.mxu0 0.0
    %1765 = vmatprep.subr.mxu0 0.0
    %1766 = vmatpush1.msra.mxu0 0.0
    %1767 = vmatprep.subr.mxu0 0.0
    %1768 = vmatpush1.msra.mxu0 0.0
    %1769 = vmatprep.subr.mxu0 0.0
    %1770 = vmatpush1.msra.mxu0 0.0
    %1771 = vmatprep.subr.mxu0 0.0
    %1772 = vmatpush1.msra.mxu0 0.0
    %1773 = vmatprep.subr.mxu0 0.0
    %1774 = vmatpush1.msra.mxu0 0.0
    %1775 = vmatprep.subr.mxu0 0.0
    %1776 = vmatpush1.msra.mxu0 0.0
    %1777 = vmatprep.subr.mxu0 0.0
    %1778 = vmatpush1.msra.mxu0 0.0
    %1779 = vmatprep.subr.mxu0 0.0
    %1780 = vmatpush1.msra.mxu0 0.0
    %1781 = vmatprep.subr.mxu0 0.0
    %1782 = vmatpush1.msra.mxu0 0.0
    %1783 = vmatprep.subr.mxu0 0.0
    %1784 = vmatpush1.msra.mxu0 0.0
    %1785 = vmatprep.subr.mxu0 0.0
    %1786 = vmatpush1.msra.mxu0 0.0
    %1787 = vmatprep.subr.mxu0 0.0
    %1788 = vmatpush1.msra.mxu0 0.0
    %1789 = vmatprep.subr.mxu0 0.0
    %1790 = vmatpush1.msra.mxu0 0.0
    %1791 = vmatprep.subr.mxu0 0.0
    %1792 = vmatpush1.msra.mxu0 0.0
    %1793 = vmatprep.subr.mxu0 0.0
    %1794 = vmatpush1.msra.mxu0 0.0
    %1795 = vmatprep.subr.mxu0 0.0
    %1796 = vmatpush1.msra.mxu0 0.0
    %1797 = vmatprep.subr.mxu0 0.0
    %1798 = vmatpush1.msra.mxu0 0.0
    %1799 = vmatprep.subr.mxu0 0.0
    %1800 = vmatpush1.msra.mxu0 0.0
    %1801 = vmatprep.subr.mxu0 0.0
    %1802 = vmatpush1.msra.mxu0 0.0
    %1803 = vmatprep.subr.mxu0 0.0
    %1804 = vmatpush1.msra.mxu0 0.0
    %1805 = vmatprep.subr.mxu0 0.0
    %1806 = vmatpush1.msra.mxu0 0.0
    %1807 = vmatprep.subr.mxu0 0.0
    %1808 = vmatpush1.msra.mxu0 0.0
    %1809 = vmatprep.subr.mxu0 0.0
    %1810 = vmatpush1.msra.mxu0 0.0
    %1811 = vmatprep.subr.mxu0 0.0
    %1812 = vmatpush1.msra.mxu0 0.0
    %1813 = vmatprep.subr.mxu0 0.0
    %1814 = vmatpush1.msra.mxu0 0.0
    %1815 = vmatprep.subr.mxu0 0.0
    %1816 = vmatpush1.msra.mxu0 0.0
    %1817 = vmatprep.subr.mxu0 0.0
    %1818 = vmatpush1.msra.mxu0 0.0
    %1819 = vmatprep.mubr.f32.mxu0 0.0
    %1820 = vmatmul.mubr.f32.gmra.mrb[0].mxu0 %v1753
    %v1821 = vpop.f32.mrb[0].mxu0
    %v1822 = vadd.f32 0.0, %v1821
    %v1823 = vpop.f32.mrb[0].mxu0
    %1824 = vdwg.mxu0
    %v1826 = vsel %vm249, %v376, 0
    %1828 = vmatprep.subr.mxu0 0.0
    %1829 = vmatpush1.msra.mxu0 %v1596
    %1830 = vmatprep.subr.mxu0 0.0
    %1831 = vmatpush1.msra.mxu0 %v1597
    %1832 = vmatprep.subr.mxu0 0.0
    %1833 = vmatpush1.msra.mxu0 0.0
    %1834 = vmatprep.subr.mxu0 0.0
    %1835 = vmatpush1.msra.mxu0 0.0
    %1836 = vmatprep.subr.mxu0 0.0
    %1837 = vmatpush1.msra.mxu0 0.0
    %1838 = vmatprep.subr.mxu0 0.0
    %1839 = vmatpush1.msra.mxu0 0.0
    %1840 = vmatprep.subr.mxu0 0.0
    %1841 = vmatpush1.msra.mxu0 0.0
    %1842 = vmatprep.subr.mxu0 0.0
    %1843 = vmatpush1.msra.mxu0 0.0
    %1844 = vmatprep.subr.mxu0 0.0
    %1845 = vmatpush1.msra.mxu0 0.0
    %1846 = vmatprep.subr.mxu0 0.0
    %1847 = vmatpush1.msra.mxu0 0.0
    %1848 = vmatprep.subr.mxu0 0.0
    %1849 = vmatpush1.msra.mxu0 0.0
    %1850 = vmatprep.subr.mxu0 0.0
    %1851 = vmatpush1.msra.mxu0 0.0
    %1852 = vmatprep.subr.mxu0 0.0
    %1853 = vmatpush1.msra.mxu0 0.0
    %1854 = vmatprep.subr.mxu0 0.0
    %1855 = vmatpush1.msra.mxu0 0.0
    %1856 = vmatprep.subr.mxu0 0.0
    %1857 = vmatpush1.msra.mxu0 0.0
    %1858 = vmatprep.subr.mxu0 0.0
    %1859 = vmatpush1.msra.mxu0 0.0
    %1860 = vmatprep.subr.mxu0 0.0
    %1861 = vmatpush1.msra.mxu0 0.0
    %1862 = vmatprep.subr.mxu0 0.0
    %1863 = vmatpush1.msra.mxu0 0.0
    %1864 = vmatprep.subr.mxu0 0.0
    %1865 = vmatpush1.msra.mxu0 0.0
    %1866 = vmatprep.subr.mxu0 0.0
    %1867 = vmatpush1.msra.mxu0 0.0
    %1868 = vmatprep.subr.mxu0 0.0
    %1869 = vmatpush1.msra.mxu0 0.0
    %1870 = vmatprep.subr.mxu0 0.0
    %1871 = vmatpush1.msra.mxu0 0.0
    %1872 = vmatprep.subr.mxu0 0.0
    %1873 = vmatpush1.msra.mxu0 0.0
    %1874 = vmatprep.subr.mxu0 0.0
    %1875 = vmatpush1.msra.mxu0 0.0
    %1876 = vmatprep.subr.mxu0 0.0
    %1877 = vmatpush1.msra.mxu0 0.0
    %1878 = vmatprep.subr.mxu0 0.0
    %1879 = vmatpush1.msra.mxu0 0.0
    %1880 = vmatprep.subr.mxu0 0.0
    %1881 = vmatpush1.msra.mxu0 0.0
    %1882 = vmatprep.subr.mxu0 0.0
    %1883 = vmatpush1.msra.mxu0 0.0
    %1884 = vmatprep.subr.mxu0 0.0
    %1885 = vmatpush1.msra.mxu0 0.0
    %1886 = vmatprep.subr.mxu0 0.0
    %1887 = vmatpush1.msra.mxu0 0.0
    %1888 = vmatprep.subr.mxu0 0.0
    %1889 = vmatpush1.msra.mxu0 0.0
    %1890 = vmatprep.subr.mxu0 0.0
    %1891 = vmatpush1.msra.mxu0 0.0
    %1892 = vmatprep.mubr.f32.mxu0 0.0
    %1893 = vmatmul.mubr.f32.gmra.mrb[0].mxu0 %v1826
    %v1894 = vpop.f32.mrb[0].mxu0
    %v1895 = vadd.f32 0.0, %v1894
    %v1896 = vpop.f32.mrb[0].mxu0
    %1897 = vdwg.mxu0
    %v1899 = vsel %vm249, %v466, 0
    %1901 = vmatprep.subr.mxu0 0.0
    %1902 = vmatpush1.msra.mxu0 %v1598
    %1903 = vmatprep.subr.mxu0 0.0
    %1904 = vmatpush1.msra.mxu0 %v1599
    %1905 = vmatprep.subr.mxu0 0.0
    %1906 = vmatpush1.msra.mxu0 0.0
    %1907 = vmatprep.subr.mxu0 0.0
    %1908 = vmatpush1.msra.mxu0 0.0
    %1909 = vmatprep.subr.mxu0 0.0
    %1910 = vmatpush1.msra.mxu0 0.0
    %1911 = vmatprep.subr.mxu0 0.0
    %1912 = vmatpush1.msra.mxu0 0.0
    %1913 = vmatprep.subr.mxu0 0.0
    %1914 = vmatpush1.msra.mxu0 0.0
    %1915 = vmatprep.subr.mxu0 0.0
    %1916 = vmatpush1.msra.mxu0 0.0
    %1917 = vmatprep.subr.mxu0 0.0
    %1918 = vmatpush1.msra.mxu0 0.0
    %1919 = vmatprep.subr.mxu0 0.0
    %1920 = vmatpush1.msra.mxu0 0.0
    %1921 = vmatprep.subr.mxu0 0.0
    %1922 = vmatpush1.msra.mxu0 0.0
    %1923 = vmatprep.subr.mxu0 0.0
    %1924 = vmatpush1.msra.mxu0 0.0
    %1925 = vmatprep.subr.mxu0 0.0
    %1926 = vmatpush1.msra.mxu0 0.0
    %1927 = vmatprep.subr.mxu0 0.0
    %1928 = vmatpush1.msra.mxu0 0.0
    %1929 = vmatprep.subr.mxu0 0.0
    %1930 = vmatpush1.msra.mxu0 0.0
    %1931 = vmatprep.subr.mxu0 0.0
    %1932 = vmatpush1.msra.mxu0 0.0
    %1933 = vmatprep.subr.mxu0 0.0
    %1934 = vmatpush1.msra.mxu0 0.0
    %1935 = vmatprep.subr.mxu0 0.0
    %1936 = vmatpush1.msra.mxu0 0.0
    %1937 = vmatprep.subr.mxu0 0.0
    %1938 = vmatpush1.msra.mxu0 0.0
    %1939 = vmatprep.subr.mxu0 0.0
    %1940 = vmatpush1.msra.mxu0 0.0
    %1941 = vmatprep.subr.mxu0 0.0
    %1942 = vmatpush1.msra.mxu0 0.0
    %1943 = vmatprep.subr.mxu0 0.0
    %1944 = vmatpush1.msra.mxu0 0.0
    %1945 = vmatprep.subr.mxu0 0.0
    %1946 = vmatpush1.msra.mxu0 0.0
    %1947 = vmatprep.subr.mxu0 0.0
    %1948 = vmatpush1.msra.mxu0 0.0
    %1949 = vmatprep.subr.mxu0 0.0
    %1950 = vmatpush1.msra.mxu0 0.0
    %1951 = vmatprep.subr.mxu0 0.0
    %1952 = vmatpush1.msra.mxu0 0.0
    %1953 = vmatprep.subr.mxu0 0.0
    %1954 = vmatpush1.msra.mxu0 0.0
    %1955 = vmatprep.subr.mxu0 0.0
    %1956 = vmatpush1.msra.mxu0 0.0
    %1957 = vmatprep.subr.mxu0 0.0
    %1958 = vmatpush1.msra.mxu0 0.0
    %1959 = vmatprep.subr.mxu0 0.0
    %1960 = vmatpush1.msra.mxu0 0.0
    %1961 = vmatprep.subr.mxu0 0.0
    %1962 = vmatpush1.msra.mxu0 0.0
    %1963 = vmatprep.subr.mxu0 0.0
    %1964 = vmatpush1.msra.mxu0 0.0
    %1965 = vmatprep.mubr.f32.mxu0 0.0
    %1966 = vmatmul.mubr.f32.gmra.mrb[0].mxu0 %v1899
    %v1967 = vpop.f32.mrb[0].mxu0
    %v1968 = vadd.f32 0.0, %v1967
    %v1969 = vpop.f32.mrb[0].mxu0
    %1970 = vdwg.mxu0
    %v1972 = vsel %vm249, %v471, 0
    %1974 = vmatprep.subr.mxu0 0.0
    %1975 = vmatpush1.msra.mxu0 %v1600
    %1976 = vmatprep.subr.mxu0 0.0
    %1977 = vmatpush1.msra.mxu0 %v1601
    %1978 = vmatprep.subr.mxu0 0.0
    %1979 = vmatpush1.msra.mxu0 0.0
    %1980 = vmatprep.subr.mxu0 0.0
    %1981 = vmatpush1.msra.mxu0 0.0
    %1982 = vmatprep.subr.mxu0 0.0
    %1983 = vmatpush1.msra.mxu0 0.0
    %1984 = vmatprep.subr.mxu0 0.0
    %1985 = vmatpush1.msra.mxu0 0.0
    %1986 = vmatprep.subr.mxu0 0.0
    %1987 = vmatpush1.msra.mxu0 0.0
    %1988 = vmatprep.subr.mxu0 0.0
    %1989 = vmatpush1.msra.mxu0 0.0
    %1990 = vmatprep.subr.mxu0 0.0
    %1991 = vmatpush1.msra.mxu0 0.0
    %1992 = vmatprep.subr.mxu0 0.0
    %1993 = vmatpush1.msra.mxu0 0.0
    %1994 = vmatprep.subr.mxu0 0.0
    %1995 = vmatpush1.msra.mxu0 0.0
    %1996 = vmatprep.subr.mxu0 0.0
    %1997 = vmatpush1.msra.mxu0 0.0
    %1998 = vmatprep.subr.mxu0 0.0
    %1999 = vmatpush1.msra.mxu0 0.0
    %2000 = vmatprep.subr.mxu0 0.0
    %2001 = vmatpush1.msra.mxu0 0.0
    %2002 = vmatprep.subr.mxu0 0.0
    %2003 = vmatpush1.msra.mxu0 0.0
    %2004 = vmatprep.subr.mxu0 0.0
    %2005 = vmatpush1.msra.mxu0 0.0
    %2006 = vmatprep.subr.mxu0 0.0
    %2007 = vmatpush1.msra.mxu0 0.0
    %2008 = vmatprep.subr.mxu0 0.0
    %2009 = vmatpush1.msra.mxu0 0.0
    %2010 = vmatprep.subr.mxu0 0.0
    %2011 = vmatpush1.msra.mxu0 0.0
    %2012 = vmatprep.subr.mxu0 0.0
    %2013 = vmatpush1.msra.mxu0 0.0
    %2014 = vmatprep.subr.mxu0 0.0
    %2015 = vmatpush1.msra.mxu0 0.0
    %2016 = vmatprep.subr.mxu0 0.0
    %2017 = vmatpush1.msra.mxu0 0.0
    %2018 = vmatprep.subr.mxu0 0.0
    %2019 = vmatpush1.msra.mxu0 0.0
    %2020 = vmatprep.subr.mxu0 0.0
    %2021 = vmatpush1.msra.mxu0 0.0
    %2022 = vmatprep.subr.mxu0 0.0
    %2023 = vmatpush1.msra.mxu0 0.0
    %2024 = vmatprep.subr.mxu0 0.0
    %2025 = vmatpush1.msra.mxu0 0.0
    %2026 = vmatprep.subr.mxu0 0.0
    %2027 = vmatpush1.msra.mxu0 0.0
    %2028 = vmatprep.subr.mxu0 0.0
    %2029 = vmatpush1.msra.mxu0 0.0
    %2030 = vmatprep.subr.mxu0 0.0
    %2031 = vmatpush1.msra.mxu0 0.0
    %2032 = vmatprep.subr.mxu0 0.0
    %2033 = vmatpush1.msra.mxu0 0.0
    %2034 = vmatprep.subr.mxu0 0.0
    %2035 = vmatpush1.msra.mxu0 0.0
    %2036 = vmatprep.subr.mxu0 0.0
    %2037 = vmatpush1.msra.mxu0 0.0
    %2038 = vmatprep.mubr.f32.mxu0 0.0
    %2039 = vmatmul.mubr.f32.gmra.mrb[0].mxu0 %v1972
    %v2040 = vpop.f32.mrb[0].mxu0
    %v2041 = vadd.f32 0.0, %v2040
    %v2042 = vpop.f32.mrb[0].mxu0
    %2043 = vdwg.mxu0
    %v2045 = vsel %vm249, %v476, 0
    %2047 = vmatprep.subr.mxu0 0.0
    %2048 = vmatpush1.msra.mxu0 %v1602
    %2049 = vmatprep.subr.mxu0 0.0
    %2050 = vmatpush1.msra.mxu0 %v1603
    %2051 = vmatprep.subr.mxu0 0.0
    %2052 = vmatpush1.msra.mxu0 0.0
    %2053 = vmatprep.subr.mxu0 0.0
    %2054 = vmatpush1.msra.mxu0 0.0
    %2055 = vmatprep.subr.mxu0 0.0
    %2056 = vmatpush1.msra.mxu0 0.0
    %2057 = vmatprep.subr.mxu0 0.0
    %2058 = vmatpush1.msra.mxu0 0.0
    %2059 = vmatprep.subr.mxu0 0.0
    %2060 = vmatpush1.msra.mxu0 0.0
    %2061 = vmatprep.subr.mxu0 0.0
    %2062 = vmatpush1.msra.mxu0 0.0
    %2063 = vmatprep.subr.mxu0 0.0
    %2064 = vmatpush1.msra.mxu0 0.0
    %2065 = vmatprep.subr.mxu0 0.0
    %2066 = vmatpush1.msra.mxu0 0.0
    %2067 = vmatprep.subr.mxu0 0.0
    %2068 = vmatpush1.msra.mxu0 0.0
    %2069 = vmatprep.subr.mxu0 0.0
    %2070 = vmatpush1.msra.mxu0 0.0
    %2071 = vmatprep.subr.mxu0 0.0
    %2072 = vmatpush1.msra.mxu0 0.0
    %2073 = vmatprep.subr.mxu0 0.0
    %2074 = vmatpush1.msra.mxu0 0.0
    %2075 = vmatprep.subr.mxu0 0.0
    %2076 = vmatpush1.msra.mxu0 0.0
    %2077 = vmatprep.subr.mxu0 0.0
    %2078 = vmatpush1.msra.mxu0 0.0
    %2079 = vmatprep.subr.mxu0 0.0
    %2080 = vmatpush1.msra.mxu0 0.0
    %2081 = vmatprep.subr.mxu0 0.0
    %2082 = vmatpush1.msra.mxu0 0.0
    %2083 = vmatprep.subr.mxu0 0.0
    %2084 = vmatpush1.msra.mxu0 0.0
    %2085 = vmatprep.subr.mxu0 0.0
    %2086 = vmatpush1.msra.mxu0 0.0
    %2087 = vmatprep.subr.mxu0 0.0
    %2088 = vmatpush1.msra.mxu0 0.0
    %2089 = vmatprep.subr.mxu0 0.0
    %2090 = vmatpush1.msra.mxu0 0.0
    %2091 = vmatprep.subr.mxu0 0.0
    %2092 = vmatpush1.msra.mxu0 0.0
    %2093 = vmatprep.subr.mxu0 0.0
    %2094 = vmatpush1.msra.mxu0 0.0
    %2095 = vmatprep.subr.mxu0 0.0
    %2096 = vmatpush1.msra.mxu0 0.0
    %2097 = vmatprep.subr.mxu0 0.0
    %2098 = vmatpush1.msra.mxu0 0.0
    %2099 = vmatprep.subr.mxu0 0.0
    %2100 = vmatpush1.msra.mxu0 0.0
    %2101 = vmatprep.subr.mxu0 0.0
    %2102 = vmatpush1.msra.mxu0 0.0
    %2103 = vmatprep.subr.mxu0 0.0
    %2104 = vmatpush1.msra.mxu0 0.0
    %2105 = vmatprep.subr.mxu0 0.0
    %2106 = vmatpush1.msra.mxu0 0.0
    %2107 = vmatprep.subr.mxu0 0.0
    %2108 = vmatpush1.msra.mxu0 0.0
    %2109 = vmatprep.subr.mxu0 0.0
    %2110 = vmatpush1.msra.mxu0 0.0
    %2111 = vmatprep.mubr.f32.mxu0 0.0
    %2112 = vmatmul.mubr.f32.gmra.mrb[0].mxu0 %v2045
    %v2113 = vpop.f32.mrb[0].mxu0
    %v2114 = vadd.f32 0.0, %v2113
    %v2115 = vpop.f32.mrb[0].mxu0
    %2116 = vdwg.mxu0
    %v2118 = vsel %vm249, %v481, 0
    %2120 = vmatprep.subr.mxu0 0.0
    %2121 = vmatpush1.msra.mxu0 %v1604
    %2122 = vmatprep.subr.mxu0 0.0
    %2123 = vmatpush1.msra.mxu0 %v1605
    %2124 = vmatprep.subr.mxu0 0.0
    %2125 = vmatpush1.msra.mxu0 0.0
    %2126 = vmatprep.subr.mxu0 0.0
    %2127 = vmatpush1.msra.mxu0 0.0
    %2128 = vmatprep.subr.mxu0 0.0
    %2129 = vmatpush1.msra.mxu0 0.0
    %2130 = vmatprep.subr.mxu0 0.0
    %2131 = vmatpush1.msra.mxu0 0.0
    %2132 = vmatprep.subr.mxu0 0.0
    %2133 = vmatpush1.msra.mxu0 0.0
    %2134 = vmatprep.subr.mxu0 0.0
    %2135 = vmatpush1.msra.mxu0 0.0
    %2136 = vmatprep.subr.mxu0 0.0
    %2137 = vmatpush1.msra.mxu0 0.0
    %2138 = vmatprep.subr.mxu0 0.0
    %2139 = vmatpush1.msra.mxu0 0.0
    %2140 = vmatprep.subr.mxu0 0.0
    %2141 = vmatpush1.msra.mxu0 0.0
    %2142 = vmatprep.subr.mxu0 0.0
    %2143 = vmatpush1.msra.mxu0 0.0
    %2144 = vmatprep.subr.mxu0 0.0
    %2145 = vmatpush1.msra.mxu0 0.0
    %2146 = vmatprep.subr.mxu0 0.0
    %2147 = vmatpush1.msra.mxu0 0.0
    %2148 = vmatprep.subr.mxu0 0.0
    %2149 = vmatpush1.msra.mxu0 0.0
    %2150 = vmatprep.subr.mxu0 0.0
    %2151 = vmatpush1.msra.mxu0 0.0
    %2152 = vmatprep.subr.mxu0 0.0
    %2153 = vmatpush1.msra.mxu0 0.0
    %2154 = vmatprep.subr.mxu0 0.0
    %2155 = vmatpush1.msra.mxu0 0.0
    %2156 = vmatprep.subr.mxu0 0.0
    %2157 = vmatpush1.msra.mxu0 0.0
    %2158 = vmatprep.subr.mxu0 0.0
    %2159 = vmatpush1.msra.mxu0 0.0
    %2160 = vmatprep.subr.mxu0 0.0
    %2161 = vmatpush1.msra.mxu0 0.0
    %2162 = vmatprep.subr.mxu0 0.0
    %2163 = vmatpush1.msra.mxu0 0.0
    %2164 = vmatprep.subr.mxu0 0.0
    %2165 = vmatpush1.msra.mxu0 0.0
    %2166 = vmatprep.subr.mxu0 0.0
    %2167 = vmatpush1.msra.mxu0 0.0
    %2168 = vmatprep.subr.mxu0 0.0
    %2169 = vmatpush1.msra.mxu0 0.0
    %2170 = vmatprep.subr.mxu0 0.0
    %2171 = vmatpush1.msra.mxu0 0.0
    %2172 = vmatprep.subr.mxu0 0.0
    %2173 = vmatpush1.msra.mxu0 0.0
    %2174 = vmatprep.subr.mxu0 0.0
    %2175 = vmatpush1.msra.mxu0 0.0
    %2176 = vmatprep.subr.mxu0 0.0
    %2177 = vmatpush1.msra.mxu0 0.0
    %2178 = vmatprep.subr.mxu0 0.0
    %2179 = vmatpush1.msra.mxu0 0.0
    %2180 = vmatprep.subr.mxu0 0.0
    %2181 = vmatpush1.msra.mxu0 0.0
    %2182 = vmatprep.subr.mxu0 0.0
    %2183 = vmatpush1.msra.mxu0 0.0
    %2184 = vmatprep.mubr.f32.mxu0 0.0
    %2185 = vmatmul.mubr.f32.gmra.mrb[0].mxu0 %v2118
    %v2186 = vpop.f32.mrb[0].mxu0
    %v2187 = vadd.f32 0.0, %v2186
    %v2188 = vpop.f32.mrb[0].mxu0
    %2189 = vdwg.mxu0
    %v2190 = vld [vmem:[%s6] sm:$0xff]
    %v2191 = vld [vmem:[%s6 + $0x8] sm:$0xff]
    %v2192 = vld [vmem:[%s6 + $0x10] sm:$0xff]
    %v2193 = vld [vmem:[%s6 + $0x18] sm:$0xff]
    %v2194 = vld [vmem:[%s7] sm:$0xff]
    %v2195 = vld [vmem:[%s7 + $0x8] sm:$0xff]
    %v2196 = vld [vmem:[%s7 + $0x10] sm:$0xff]
    %v2197 = vld [vmem:[%s7 + $0x18] sm:$0xff]
    %2199 = vset.pattern.permute.xlu0 0
    %2200 = vperm.xlu0 %2199, %v2194
    %v2201 = vpop.permute.xlu0 %2200
    %2204 = vset.pattern.permute.xlu0 0
    %2205 = vperm.xlu0 %2204, %v2195
    %v2206 = vpop.permute.xlu0 %2205
    %2209 = vset.pattern.permute.xlu0 0
    %2210 = vperm.xlu0 %2209, %v2196
    %v2211 = vpop.permute.xlu0 %2210
    %2214 = vset.pattern.permute.xlu0 0
    %2215 = vperm.xlu0 %2214, %v2197
    %v2216 = vpop.permute.xlu0 %2215
    %v2219 = vsel %vm46, %v2190, 0
    %v2222 = vsel %vm46, %v2191, 0
    %v2225 = vsel %vm46, %v2192, 0
    %v2228 = vsel %vm46, %v2193, 0
    %2230 = vmatprep.subr.mxu0 0.0
    %2231 = vmatpush1.msra.mxu0 %v1676
    %2232 = vmatprep.subr.mxu0 0.0
    %2233 = vmatpush1.msra.mxu0 %v1749
    %2234 = vmatprep.subr.mxu0 0.0
    %2235 = vmatpush1.msra.mxu0 %v1822
    %2236 = vmatprep.subr.mxu0 0.0
    %2237 = vmatpush1.msra.mxu0 %v1895
    %2238 = vmatprep.subr.mxu0 0.0
    %2239 = vmatpush1.msra.mxu0 0.0
    %2240 = vmatprep.subr.mxu0 0.0
    %2241 = vmatpush1.msra.mxu0 0.0
    %2242 = vmatprep.subr.mxu0 0.0
    %2243 = vmatpush1.msra.mxu0 0.0
    %2244 = vmatprep.subr.mxu0 0.0
    %2245 = vmatpush1.msra.mxu0 0.0
    %2246 = vmatprep.subr.mxu0 0.0
    %2247 = vmatpush1.msra.mxu0 0.0
    %2248 = vmatprep.subr.mxu0 0.0
    %2249 = vmatpush1.msra.mxu0 0.0
    %2250 = vmatprep.subr.mxu0 0.0
    %2251 = vmatpush1.msra.mxu0 0.0
    %2252 = vmatprep.subr.mxu0 0.0
    %2253 = vmatpush1.msra.mxu0 0.0
    %2254 = vmatprep.subr.mxu0 0.0
    %2255 = vmatpush1.msra.mxu0 0.0
    %2256 = vmatprep.subr.mxu0 0.0
    %2257 = vmatpush1.msra.mxu0 0.0
    %2258 = vmatprep.subr.mxu0 0.0
    %2259 = vmatpush1.msra.mxu0 0.0
    %2260 = vmatprep.subr.mxu0 0.0
    %2261 = vmatpush1.msra.mxu0 0.0
    %2262 = vmatprep.subr.mxu0 0.0
    %2263 = vmatpush1.msra.mxu0 0.0
    %2264 = vmatprep.subr.mxu0 0.0
    %2265 = vmatpush1.msra.mxu0 0.0
    %2266 = vmatprep.subr.mxu0 0.0
    %2267 = vmatpush1.msra.mxu0 0.0
    %2268 = vmatprep.subr.mxu0 0.0
    %2269 = vmatpush1.msra.mxu0 0.0
    %2270 = vmatprep.subr.mxu0 0.0
    %2271 = vmatpush1.msra.mxu0 0.0
    %2272 = vmatprep.subr.mxu0 0.0
    %2273 = vmatpush1.msra.mxu0 0.0
    %2274 = vmatprep.subr.mxu0 0.0
    %2275 = vmatpush1.msra.mxu0 0.0
    %2276 = vmatprep.subr.mxu0 0.0
    %2277 = vmatpush1.msra.mxu0 0.0
    %2278 = vmatprep.subr.mxu0 0.0
    %2279 = vmatpush1.msra.mxu0 0.0
    %2280 = vmatprep.subr.mxu0 0.0
    %2281 = vmatpush1.msra.mxu0 0.0
    %2282 = vmatprep.subr.mxu0 0.0
    %2283 = vmatpush1.msra.mxu0 0.0
    %2284 = vmatprep.subr.mxu0 0.0
    %2285 = vmatpush1.msra.mxu0 0.0
    %2286 = vmatprep.subr.mxu0 0.0
    %2287 = vmatpush1.msra.mxu0 0.0
    %2288 = vmatprep.subr.mxu0 0.0
    %2289 = vmatpush1.msra.mxu0 0.0
    %2290 = vmatprep.subr.mxu0 0.0
    %2291 = vmatpush1.msra.mxu0 0.0
    %2292 = vmatprep.subr.mxu0 0.0
    %2293 = vmatpush1.msra.mxu0 0.0
    %2294 = vmatprep.mubr.f32.mxu0 0.0
    %2295 = vmatmul.mubr.f32.gmra.mrb[0].mxu0 %v2219
    %v2296 = vpop.f32.mrb[0].mxu0
    %v2297 = vadd.f32 %v2201, %v2296
    %v2298 = vpop.f32.mrb[0].mxu0
    %2299 = vmatprep.mubr.f32.mxu0 0.0
    %2300 = vmatmul.mubr.f32.gmra.mrb[0].mxu0 %v2222
    %v2301 = vpop.f32.mrb[0].mxu0
    %v2302 = vadd.f32 %v2206, %v2301
    %v2303 = vpop.f32.mrb[0].mxu0
    %2304 = vmatprep.mubr.f32.mxu0 0.0
    %2305 = vmatmul.mubr.f32.gmra.mrb[0].mxu0 %v2225
    %v2306 = vpop.f32.mrb[0].mxu0
    %v2307 = vadd.f32 %v2211, %v2306
    %v2308 = vpop.f32.mrb[0].mxu0
    %2309 = vmatprep.mubr.f32.mxu0 0.0
    %2310 = vmatmul.mubr.f32.gmra.mrb[0].mxu0 %v2228
    %v2311 = vpop.f32.mrb[0].mxu0
    %v2312 = vadd.f32 %v2216, %v2311
    %v2313 = vpop.f32.mrb[0].mxu0
    %2314 = vdwg.mxu0
    %2315 = vmatprep.subr.mxu0 0.0
    %2316 = vmatpush1.msra.mxu0 %v1968
    %2317 = vmatprep.subr.mxu0 0.0
    %2318 = vmatpush1.msra.mxu0 %v2041
    %2319 = vmatprep.subr.mxu0 0.0
    %2320 = vmatpush1.msra.mxu0 %v2114
    %2321 = vmatprep.subr.mxu0 0.0
    %2322 = vmatpush1.msra.mxu0 %v2187
    %2323 = vmatprep.subr.mxu0 0.0
    %2324 = vmatpush1.msra.mxu0 0.0
    %2325 = vmatprep.subr.mxu0 0.0
    %2326 = vmatpush1.msra.mxu0 0.0
    %2327 = vmatprep.subr.mxu0 0.0
    %2328 = vmatpush1.msra.mxu0 0.0
    %2329 = vmatprep.subr.mxu0 0.0
    %2330 = vmatpush1.msra.mxu0 0.0
    %2331 = vmatprep.subr.mxu0 0.0
    %2332 = vmatpush1.msra.mxu0 0.0
    %2333 = vmatprep.subr.mxu0 0.0
    %2334 = vmatpush1.msra.mxu0 0.0
    %2335 = vmatprep.subr.mxu0 0.0
    %2336 = vmatpush1.msra.mxu0 0.0
    %2337 = vmatprep.subr.mxu0 0.0
    %2338 = vmatpush1.msra.mxu0 0.0
    %2339 = vmatprep.subr.mxu0 0.0
    %2340 = vmatpush1.msra.mxu0 0.0
    %2341 = vmatprep.subr.mxu0 0.0
    %2342 = vmatpush1.msra.mxu0 0.0
    %2343 = vmatprep.subr.mxu0 0.0
    %2344 = vmatpush1.msra.mxu0 0.0
    %2345 = vmatprep.subr.mxu0 0.0
    %2346 = vmatpush1.msra.mxu0 0.0
    %2347 = vmatprep.subr.mxu0 0.0
    %2348 = vmatpush1.msra.mxu0 0.0
    %2349 = vmatprep.subr.mxu0 0.0
    %2350 = vmatpush1.msra.mxu0 0.0
    %2351 = vmatprep.subr.mxu0 0.0
    %2352 = vmatpush1.msra.mxu0 0.0
    %2353 = vmatprep.subr.mxu0 0.0
    %2354 = vmatpush1.msra.mxu0 0.0
    %2355 = vmatprep.subr.mxu0 0.0
    %2356 = vmatpush1.msra.mxu0 0.0
    %2357 = vmatprep.subr.mxu0 0.0
    %2358 = vmatpush1.msra.mxu0 0.0
    %2359 = vmatprep.subr.mxu0 0.0
    %2360 = vmatpush1.msra.mxu0 0.0
    %2361 = vmatprep.subr.mxu0 0.0
    %2362 = vmatpush1.msra.mxu0 0.0
    %2363 = vmatprep.subr.mxu0 0.0
    %2364 = vmatpush1.msra.mxu0 0.0
    %2365 = vmatprep.subr.mxu0 0.0
    %2366 = vmatpush1.msra.mxu0 0.0
    %2367 = vmatprep.subr.mxu0 0.0
    %2368 = vmatpush1.msra.mxu0 0.0
    %2369 = vmatprep.subr.mxu0 0.0
    %2370 = vmatpush1.msra.mxu0 0.0
    %2371 = vmatprep.subr.mxu0 0.0
    %2372 = vmatpush1.msra.mxu0 0.0
    %2373 = vmatprep.subr.mxu0 0.0
    %2374 = vmatpush1.msra.mxu0 0.0
    %2375 = vmatprep.subr.mxu0 0.0
    %2376 = vmatpush1.msra.mxu0 0.0
    %2377 = vmatprep.subr.mxu0 0.0
    %2378 = vmatpush1.msra.mxu0 0.0
    %2379 = vmatprep.mubr.f32.mxu0 0.0
    %2380 = vmatmul.mubr.f32.gmra.mrb[0].mxu0 %v2219
    %v2381 = vpop.f32.mrb[0].mxu0
    %v2382 = vadd.f32 %v2201, %v2381
    %v2383 = vpop.f32.mrb[0].mxu0
    %2384 = vmatprep.mubr.f32.mxu0 0.0
    %2385 = vmatmul.mubr.f32.gmra.mrb[0].mxu0 %v2222
    %v2386 = vpop.f32.mrb[0].mxu0
    %v2387 = vadd.f32 %v2206, %v2386
    %v2388 = vpop.f32.mrb[0].mxu0
    %2389 = vmatprep.mubr.f32.mxu0 0.0
    %2390 = vmatmul.mubr.f32.gmra.mrb[0].mxu0 %v2225
    %v2391 = vpop.f32.mrb[0].mxu0
    %v2392 = vadd.f32 %v2211, %v2391
    %v2393 = vpop.f32.mrb[0].mxu0
    %2394 = vmatprep.mubr.f32.mxu0 0.0
    %2395 = vmatmul.mubr.f32.gmra.mrb[0].mxu0 %v2228
    %v2396 = vpop.f32.mrb[0].mxu0
    %v2397 = vadd.f32 %v2216, %v2396
    %v2398 = vpop.f32.mrb[0].mxu0
    %2399 = vdwg.mxu0
    %v2400 = vadd.f32 %v30, %v2297
    %v2401 = vadd.f32 %v31, %v2302
    %v2402 = vadd.f32 %v32, %v2307
    %v2403 = vadd.f32 %v33, %v2312
    %v2404 = vadd.f32 %v34, %v2382
    %v2405 = vadd.f32 %v35, %v2387
    %v2406 = vadd.f32 %v36, %v2392
    %v2407 = vadd.f32 %v37, %v2397
    %2408 = vst.msk [vmem:[#allocation2] sm:$0xff] %vm1389, %v2400
    %2409 = vst.msk [vmem:[#allocation2 + $0x8] sm:$0xff] %vm1389, %v2401
    %2410 = vst.msk [vmem:[#allocation2 + $0x10] sm:$0xff] %vm1389, %v2402
    %2411 = vst.msk [vmem:[#allocation2 + $0x18] sm:$0xff] %vm1389, %v2403
    %2412 = vst.msk [vmem:[#allocation2 + $0x20] sm:$0xff] %vm1389, %v2404
    %2413 = vst.msk [vmem:[#allocation2 + $0x28] sm:$0xff] %vm1389, %v2405
    %2414 = vst.msk [vmem:[#allocation2 + $0x30] sm:$0xff] %vm1389, %v2406
    %2415 = vst.msk [vmem:[#allocation2 + $0x38] sm:$0xff] %vm1389, %v2407
    // Predicated region
    $region34: #{tpu_custom_call.1} parent=1 // pred_check
      _
    $region35: #{tpu_custom_call.1} parent=1 // pred_check_branch
      %2417 = sbr.rel (0) target = $region37
    $region36: #{tpu_custom_call.1} parent=1 // pred_region
      %s2419 = ssub.s32 1024, 1024
      %2420 = vsyncadd [#allocation3], %s2419
      %s2421 = sshll.u32 [#allocation2], 4
      %s2422 = int_to_ptr.vmem [resolvable:$true] %s2421
      %2427 = dma.vmem_to_hbm [thread:$0]  %s2422, 1024, %s8, [#allocation3], 128, 128, 8
    $region37: #{tpu_custom_call.1} parent=1 // pred_fallthru
      _
    // Predicated region
    $region38: #{tpu_custom_call.1} parent=1 // pred_check
      _
    $region39: #{tpu_custom_call.1} parent=1 // pred_check_branch
      %2429 = sbr.rel (0) target = $region41
    $region40: #{tpu_custom_call.1} parent=1 // pred_region
      %2430 = dma.done [#allocation3], 1024
    $region41: #{tpu_custom_call.1} parent=1 // pred_fallthru
      _
    %2431 = vsyncpa [#allocation3], 1

</llo_original>
